<compile_context>
chip_gen: v5e
topology: v5e:2x2
jax: 0.10.0
libtpu: 0.0.40
codegen_flags: <defaults>
</compile_context>

<pallas_src>
import functools

import jax
import jax.numpy as jnp
import numpy as np
from jax.experimental import pallas as pl
from jax.experimental.pallas import tpu as pltpu

SUBLANE = 8         # feature padding target (feature axis sits on sublanes)
DEFAULT_TB = 128    # batch tile on the lane axis (keep 128 so batch=256 still
                    # yields >=2 grid steps for the parallel axis on v7x)


def _round_up(v, m):
    return (v + m - 1) // m * m


# ----------------------------------------------------------------------------
# Pallas kernel: the whole KAN stack; activation stays resident on-chip
# ----------------------------------------------------------------------------
def _kan_stack_kernel(*refs, grid0, inv_h, num_knots, spline_order, num_layers,
                      compute_dtype):
    """refs = (xT, w_0, ..., w_{L-1}, outT).

    xT : (fin_p0, TB) f32             transposed activation tile (batch on lanes)
    w_l: (fout_p, (C+1)*fin_p) cdtype combined weight: col block 0 = base_weight,
                                      col block c+1 = spline_weight*scaler for
                                      coefficient c (zero-padded rows/cols)
    outT: (fout_p_last, TB) f32
    Padded feature rows of h stay exactly 0 across layers (zero weight rows),
    and padded weight columns kill any non-zero bases of padded inputs.
    """
    x_ref = refs[0]
    o_ref = refs[1 + num_layers]

    P = num_knots                     # grid_size + 2*spline_order + 1
    n_blocks = P - spline_order       # C + 1

    h = x_ref[...].astype(jnp.float32)          # (fin_p, TB), f32 recursion

    for l in range(num_layers):
        w = refs[1 + l][...]                    # (fout_p, (C+1)*fin_p)
        fin_p = w.shape[1] // n_blocks
        assert h.shape[0] == fin_p, (h.shape, w.shape)

        # ---- base activation: SiLU; reciprocal on the EUP slot --------------
        silu = h * pl.reciprocal(1.0 + jnp.exp(-h), approx=True)

        # ---- spline branch: uniform-grid Cox-de Boor (VPU work) -------------
        # normalized knot coordinate: knot j sits exactly at t == j
        t = (h - grid0) * inv_h
        cmp = [(t >= float(j)).astype(jnp.float32) for j in range(P)]
        bases = [cmp[j] - cmp[j + 1] for j in range(P - 1)]   # order-0, 0/1
        tm = [t - float(j) for j in range(P - 2)]             # reused over k
        for k in range(1, spline_order + 1):
            inv_k = 1.0 / k
            nb = P - 1 - k
            for j in range(nb):                 # in-place update caps live bases
                bases[j] = (tm[j] * bases[j]
                            + (float(k + 1) - tm[j]) * bases[j + 1]) * inv_k
            bases = bases[:nb]                  # ends with C = grid_size + order

        # ---- single fused matmul: [SiLU; B_0; ...; B_{C-1}] vs combined W ---
        stack = jnp.concatenate(
            [silu.astype(compute_dtype)] + [b.astype(compute_dtype) for b in bases],
            axis=0)                                            # ((C+1)*fin_p, TB)
        y = jnp.dot(w, stack, preferred_element_type=jnp.float32)  # (fout_p, TB)

        h = jnp.tanh(y) if l < num_layers - 1 else y

    o_ref[...] = h.astype(o_ref.dtype)


# ----------------------------------------------------------------------------
# Host-side weight prep (done once, outside the forward path)
# ----------------------------------------------------------------------------
def prepare_kan_weights(params, compute_dtype):
    """Per layer, fold spline_scaler into spline_weight and build one combined
    matrix W_comb of shape (fout_p, (C+1)*fin_p):
        W_comb[:, 0:fin_p]                    = base_weight
        W_comb[:, (c+1)*fin_p:(c+1)*fin_p+fin] = spline_weight[:, :, c] * scaler
    Features are padded only to a multiple of 8 (sublanes)."""
    prepped = []
    for base_w, spline_w, spline_sc in params:
        fout, fin = base_w.shape
        C = spline_w.shape[-1]
        fin_p = _round_up(fin, SUBLANE)
        fout_p = _round_up(fout, SUBLANE)

        sw = spline_w * spline_sc[:, :, None]                 # (out, in, C)
        wc = jnp.zeros((fout_p, (C + 1) * fin_p), jnp.float32)
        wc = wc.at[:fout, :fin].set(base_w)
        for c in range(C):
            col0 = (c + 1) * fin_p
            wc = wc.at[:fout, col0:col0 + fin].set(sw[:, :, c])
        prepped.append(wc.astype(compute_dtype))
    return tuple(prepped)


# ----------------------------------------------------------------------------
# Forward: one fused pallas_call over a batch grid (batch on the lane axis)
# ----------------------------------------------------------------------------
@functools.partial(
    jax.jit,
    static_argnames=("grid0", "inv_h", "num_knots", "spline_order",
                     "out_features", "tb"))
def kan_forward_pallas(x, prepped, *, grid0, inv_h, num_knots, spline_order,
                       out_features, tb=DEFAULT_TB):
    B, fin = x.shape
    num_layers = len(prepped)
    compute_dtype = prepped[0].dtype
    n_blocks = num_knots - spline_order                 # C + 1
    fin_p0 = prepped[0].shape[1] // n_blocks
    fout_last = prepped[-1].shape[0]

    bp = _round_up(max(B, 1), tb)
    xT = jnp.zeros((fin_p0, bp), jnp.float32).at[:fin, :B].set(
        x.T.astype(jnp.float32))

    kernel = functools.partial(
        _kan_stack_kernel,
        grid0=float(grid0), inv_h=float(inv_h), num_knots=int(num_knots),
        spline_order=int(spline_order), num_layers=num_layers,
        compute_dtype=compute_dtype)

    in_specs = [pl.BlockSpec((fin_p0, tb), lambda i: (0, i))]
    for w in prepped:
        # whole (small) weight resident every step; index_map constant.
        in_specs.append(pl.BlockSpec(w.shape, lambda i: (0, 0)))

    out = pl.pallas_call(
        kernel,
        out_shape=jax.ShapeDtypeStruct((fout_last, bp), jnp.float32),
        grid=(bp // tb,),
        in_specs=in_specs,
        out_specs=pl.BlockSpec((fout_last, tb), lambda i: (0, i)),
        compiler_params=pltpu.CompilerParams(
            dimension_semantics=("parallel",),      # megacore-shard the batch
        ),
    )(xT, *prepped)

    return out[:out_features, :B].T


# ----------------------------------------------------------------------------
# Synthetic parameters (same shapes as the PyTorch KANLinear parameters)
# ----------------------------------------------------------------------------
def make_kan_params(key, layers_hidden, grid_size=5, spline_order=3):
    # TODO(synk): the PyTorch reset_parameters() initializes spline_weight via a
    # least-squares curve2coeff fit of noise; here synthetic weights of the same
    # shapes are used (initialization scheme does not change forward semantics).
    params = []
    for fin, fout in zip(layers_hidden, layers_hidden[1:]):
        key, k1, k2, k3 = jax.random.split(key, 4)
        bound = 1.0 / np.sqrt(fin)
        base_w = jax.random.uniform(k1, (fout, fin), jnp.float32, -bound, bound)
        spline_w = 0.1 * jax.random.normal(
            k2, (fout, fin, grid_size + spline_order), jnp.float32)
        spline_sc = jax.random.uniform(k3, (fout, fin), jnp.float32, -bound, bound)
        params.append((base_w, spline_w, spline_sc))
    return params


# pure-JAX reference mirroring the PyTorch forward exactly (for verification)
def kan_forward_ref(x, params, grid_vals, spline_order):
    g = jnp.asarray(grid_vals, jnp.float32)
    n = len(params)
    h = x
    for li, (bw, sw, sc) in enumerate(params):
        base = (h * jax.nn.sigmoid(h)) @ bw.T
        xe = h[:, :, None]
        bases = ((xe >= g[:-1]) & (xe < g[1:])).astype(h.dtype)
        for k in range(1, spline_order + 1):
            bases = ((xe - g[:-(k + 1)]) / (g[k:-1] - g[:-(k + 1)]) * bases[:, :, :-1]
                     + (g[k + 1:] - xe) / (g[k + 1:] - g[1:-k]) * bases[:, :, 1:])
        sw_scaled = sw * sc[:, :, None]
        spline = bases.reshape(h.shape[0], -1) @ sw_scaled.reshape(sw.shape[0], -1).T
        h = base + spline
        if li < n - 1:
            h = jnp.tanh(h)
    return h


if __name__ == "__main__":
    # small shapes: batch=256, layers_hidden=[4, 32, 16]
    layers_hidden = [4, 32, 16]
    grid_size, spline_order = 5, 3
    grid_range = [-1.0, 1.0]

    hstep = (grid_range[1] - grid_range[0]) / grid_size
    grid_np = (np.arange(-spline_order, grid_size + spline_order + 1,
                         dtype=np.float64) * hstep + grid_range[0]).astype(np.float32)

    key = jax.random.PRNGKey(0)
    key, kx = jax.random.split(key)
    batch = 256
    x = jax.random.normal(kx, (batch, layers_hidden[0]), jnp.float32)
    params = make_kan_params(key, layers_hidden, grid_size, spline_order)

    ref = kan_forward_ref(x, params, grid_np, spline_order)

    common = dict(grid0=float(grid_np[0]), inv_h=float(1.0 / hstep),
                  num_knots=int(grid_np.shape[0]), spline_order=spline_order,
                  out_features=layers_hidden[-1], tb=DEFAULT_TB)

    # f32 matmul operands: tight correctness check (2e-3 allows the approx
    # reciprocal in SiLU and the normalized-knot reformulation).
    prepped_f32 = prepare_kan_weights(params, jnp.float32)
    out_f32 = jax.block_until_ready(kan_forward_pallas(x, prepped_f32, **common))
    np.testing.assert_allclose(np.asarray(out_f32), np.asarray(ref),
                               rtol=2e-3, atol=2e-3)

    # bf16 matmul operands (MXU fast path on all gens), f32 accumulation.
    # Layout/ordering correctness is already pinned down by the tight f32 check;
    # this only sanity-checks the dtype path.
    prepped_bf16 = prepare_kan_weights(params, jnp.bfloat16)
    out_bf16 = jax.block_until_ready(kan_forward_pallas(x, prepped_bf16, **common))
    np.testing.assert_allclose(np.asarray(out_bf16), np.asarray(ref),
                               rtol=1e-1, atol=1e-1)

    print("KERNEL_OK")
</pallas_src>

<mosaic_0001>
module attributes {stable_mosaic.version = 11 : i64} {
  func.func @_kan_stack_kernel(%arg0: i32, %arg1: memref<8x128xf32, #tpu.memory_space<vmem>>, %arg2: memref<32x72xf32, #tpu.memory_space<vmem>>, %arg3: memref<16x288xf32, #tpu.memory_space<vmem>>, %arg4: memref<16x128xf32, #tpu.memory_space<vmem>>) attributes {dimension_semantics = [#tpu.dimension_semantics<parallel>], iteration_bounds = array<i64: 2>, scalar_prefetch = 0 : i64, scratch_operands = 0 : i64, tpu.core_type = #tpu.core_type<tc>, window_params = [{transform_indices = @transform_0, window_bounds = array<i64: 8, 128>}, {pipeline_mode = #tpu.pipeline_mode<synchronous>, transform_indices = @transform_1, window_bounds = array<i64: 32, 72>}, {pipeline_mode = #tpu.pipeline_mode<synchronous>, transform_indices = @transform_2, window_bounds = array<i64: 16, 288>}, {transform_indices = @transform_3, window_bounds = array<i64: 16, 128>}]} {
    %c0 = arith.constant 0 : index
    %c0_0 = arith.constant 0 : index
    %0 = vector.load %arg1[%c0, %c0_0] : memref<8x128xf32, #tpu.memory_space<vmem>>, vector<8x128xf32>
    %c0_1 = arith.constant 0 : index
    %c0_2 = arith.constant 0 : index
    %1 = vector.load %arg2[%c0_1, %c0_2] : memref<32x72xf32, #tpu.memory_space<vmem>>, vector<32x72xf32>
    %cst = arith.constant 0.000000e+00 : f32
    %2 = vector.broadcast %cst : f32 to vector<8x128xf32>
    %3 = arith.subf %2, %0 : vector<8x128xf32>
    %4 = math.exp %3 : vector<8x128xf32>
    %cst_3 = arith.constant 1.000000e+00 : f32
    %5 = vector.broadcast %cst_3 : f32 to vector<8x128xf32>
    %6 = arith.addf %5, %4 : vector<8x128xf32>
    %7 = tpu.reciprocal %6 {approx = true} : vector<8x128xf32> -> vector<8x128xf32>
    %8 = arith.mulf %0, %7 : vector<8x128xf32>
    %cst_4 = arith.constant -2.200000e+00 : f32
    %9 = vector.broadcast %cst_4 : f32 to vector<8x128xf32>
    %10 = arith.subf %0, %9 : vector<8x128xf32>
    %cst_5 = arith.constant 2.500000e+00 : f32
    %11 = vector.broadcast %cst_5 : f32 to vector<8x128xf32>
    %12 = arith.mulf %10, %11 : vector<8x128xf32>
    %cst_6 = arith.constant 0.000000e+00 : f32
    %13 = vector.broadcast %cst_6 : f32 to vector<8x128xf32>
    %14 = arith.cmpf oge, %12, %13 : vector<8x128xf32>
    %15 = arith.extui %14 : vector<8x128xi1> to vector<8x128xi32>
    %16 = arith.sitofp %15 : vector<8x128xi32> to vector<8x128xf32>
    %cst_7 = arith.constant 1.000000e+00 : f32
    %17 = vector.broadcast %cst_7 : f32 to vector<8x128xf32>
    %18 = arith.cmpf oge, %12, %17 : vector<8x128xf32>
    %19 = arith.extui %18 : vector<8x128xi1> to vector<8x128xi32>
    %20 = arith.sitofp %19 : vector<8x128xi32> to vector<8x128xf32>
    %cst_8 = arith.constant 2.000000e+00 : f32
    %21 = vector.broadcast %cst_8 : f32 to vector<8x128xf32>
    %22 = arith.cmpf oge, %12, %21 : vector<8x128xf32>
    %23 = arith.extui %22 : vector<8x128xi1> to vector<8x128xi32>
    %24 = arith.sitofp %23 : vector<8x128xi32> to vector<8x128xf32>
    %cst_9 = arith.constant 3.000000e+00 : f32
    %25 = vector.broadcast %cst_9 : f32 to vector<8x128xf32>
    %26 = arith.cmpf oge, %12, %25 : vector<8x128xf32>
    %27 = arith.extui %26 : vector<8x128xi1> to vector<8x128xi32>
    %28 = arith.sitofp %27 : vector<8x128xi32> to vector<8x128xf32>
    %cst_10 = arith.constant 4.000000e+00 : f32
    %29 = vector.broadcast %cst_10 : f32 to vector<8x128xf32>
    %30 = arith.cmpf oge, %12, %29 : vector<8x128xf32>
    %31 = arith.extui %30 : vector<8x128xi1> to vector<8x128xi32>
    %32 = arith.sitofp %31 : vector<8x128xi32> to vector<8x128xf32>
    %cst_11 = arith.constant 5.000000e+00 : f32
    %33 = vector.broadcast %cst_11 : f32 to vector<8x128xf32>
    %34 = arith.cmpf oge, %12, %33 : vector<8x128xf32>
    %35 = arith.extui %34 : vector<8x128xi1> to vector<8x128xi32>
    %36 = arith.sitofp %35 : vector<8x128xi32> to vector<8x128xf32>
    %cst_12 = arith.constant 6.000000e+00 : f32
    %37 = vector.broadcast %cst_12 : f32 to vector<8x128xf32>
    %38 = arith.cmpf oge, %12, %37 : vector<8x128xf32>
    %39 = arith.extui %38 : vector<8x128xi1> to vector<8x128xi32>
    %40 = arith.sitofp %39 : vector<8x128xi32> to vector<8x128xf32>
    %cst_13 = arith.constant 7.000000e+00 : f32
    %41 = vector.broadcast %cst_13 : f32 to vector<8x128xf32>
    %42 = arith.cmpf oge, %12, %41 : vector<8x128xf32>
    %43 = arith.extui %42 : vector<8x128xi1> to vector<8x128xi32>
    %44 = arith.sitofp %43 : vector<8x128xi32> to vector<8x128xf32>
    %cst_14 = arith.constant 8.000000e+00 : f32
    %45 = vector.broadcast %cst_14 : f32 to vector<8x128xf32>
    %46 = arith.cmpf oge, %12, %45 : vector<8x128xf32>
    %47 = arith.extui %46 : vector<8x128xi1> to vector<8x128xi32>
    %48 = arith.sitofp %47 : vector<8x128xi32> to vector<8x128xf32>
    %cst_15 = arith.constant 9.000000e+00 : f32
    %49 = vector.broadcast %cst_15 : f32 to vector<8x128xf32>
    %50 = arith.cmpf oge, %12, %49 : vector<8x128xf32>
    %51 = arith.extui %50 : vector<8x128xi1> to vector<8x128xi32>
    %52 = arith.sitofp %51 : vector<8x128xi32> to vector<8x128xf32>
    %cst_16 = arith.constant 1.000000e+01 : f32
    %53 = vector.broadcast %cst_16 : f32 to vector<8x128xf32>
    %54 = arith.cmpf oge, %12, %53 : vector<8x128xf32>
    %55 = arith.extui %54 : vector<8x128xi1> to vector<8x128xi32>
    %56 = arith.sitofp %55 : vector<8x128xi32> to vector<8x128xf32>
    %cst_17 = arith.constant 1.100000e+01 : f32
    %57 = vector.broadcast %cst_17 : f32 to vector<8x128xf32>
    %58 = arith.cmpf oge, %12, %57 : vector<8x128xf32>
    %59 = arith.extui %58 : vector<8x128xi1> to vector<8x128xi32>
    %60 = arith.sitofp %59 : vector<8x128xi32> to vector<8x128xf32>
    %61 = arith.subf %16, %20 : vector<8x128xf32>
    %62 = arith.subf %20, %24 : vector<8x128xf32>
    %63 = arith.subf %24, %28 : vector<8x128xf32>
    %64 = arith.subf %28, %32 : vector<8x128xf32>
    %65 = arith.subf %32, %36 : vector<8x128xf32>
    %66 = arith.subf %36, %40 : vector<8x128xf32>
    %67 = arith.subf %40, %44 : vector<8x128xf32>
    %68 = arith.subf %44, %48 : vector<8x128xf32>
    %69 = arith.subf %48, %52 : vector<8x128xf32>
    %70 = arith.subf %52, %56 : vector<8x128xf32>
    %71 = arith.subf %56, %60 : vector<8x128xf32>
    %cst_18 = arith.constant 0.000000e+00 : f32
    %72 = vector.broadcast %cst_18 : f32 to vector<8x128xf32>
    %73 = arith.subf %12, %72 : vector<8x128xf32>
    %cst_19 = arith.constant 1.000000e+00 : f32
    %74 = vector.broadcast %cst_19 : f32 to vector<8x128xf32>
    %75 = arith.subf %12, %74 : vector<8x128xf32>
    %cst_20 = arith.constant 2.000000e+00 : f32
    %76 = vector.broadcast %cst_20 : f32 to vector<8x128xf32>
    %77 = arith.subf %12, %76 : vector<8x128xf32>
    %cst_21 = arith.constant 3.000000e+00 : f32
    %78 = vector.broadcast %cst_21 : f32 to vector<8x128xf32>
    %79 = arith.subf %12, %78 : vector<8x128xf32>
    %cst_22 = arith.constant 4.000000e+00 : f32
    %80 = vector.broadcast %cst_22 : f32 to vector<8x128xf32>
    %81 = arith.subf %12, %80 : vector<8x128xf32>
    %cst_23 = arith.constant 5.000000e+00 : f32
    %82 = vector.broadcast %cst_23 : f32 to vector<8x128xf32>
    %83 = arith.subf %12, %82 : vector<8x128xf32>
    %cst_24 = arith.constant 6.000000e+00 : f32
    %84 = vector.broadcast %cst_24 : f32 to vector<8x128xf32>
    %85 = arith.subf %12, %84 : vector<8x128xf32>
    %cst_25 = arith.constant 7.000000e+00 : f32
    %86 = vector.broadcast %cst_25 : f32 to vector<8x128xf32>
    %87 = arith.subf %12, %86 : vector<8x128xf32>
    %cst_26 = arith.constant 8.000000e+00 : f32
    %88 = vector.broadcast %cst_26 : f32 to vector<8x128xf32>
    %89 = arith.subf %12, %88 : vector<8x128xf32>
    %cst_27 = arith.constant 9.000000e+00 : f32
    %90 = vector.broadcast %cst_27 : f32 to vector<8x128xf32>
    %91 = arith.subf %12, %90 : vector<8x128xf32>
    %92 = arith.mulf %73, %61 : vector<8x128xf32>
    %cst_28 = arith.constant 2.000000e+00 : f32
    %93 = vector.broadcast %cst_28 : f32 to vector<8x128xf32>
    %94 = arith.subf %93, %73 : vector<8x128xf32>
    %95 = arith.mulf %94, %62 : vector<8x128xf32>
    %96 = arith.addf %92, %95 : vector<8x128xf32>
    %cst_29 = arith.constant 1.000000e+00 : f32
    %97 = vector.broadcast %cst_29 : f32 to vector<8x128xf32>
    %98 = arith.mulf %96, %97 : vector<8x128xf32>
    %99 = arith.mulf %75, %62 : vector<8x128xf32>
    %cst_30 = arith.constant 2.000000e+00 : f32
    %100 = vector.broadcast %cst_30 : f32 to vector<8x128xf32>
    %101 = arith.subf %100, %75 : vector<8x128xf32>
    %102 = arith.mulf %101, %63 : vector<8x128xf32>
    %103 = arith.addf %99, %102 : vector<8x128xf32>
    %cst_31 = arith.constant 1.000000e+00 : f32
    %104 = vector.broadcast %cst_31 : f32 to vector<8x128xf32>
    %105 = arith.mulf %103, %104 : vector<8x128xf32>
    %106 = arith.mulf %77, %63 : vector<8x128xf32>
    %cst_32 = arith.constant 2.000000e+00 : f32
    %107 = vector.broadcast %cst_32 : f32 to vector<8x128xf32>
    %108 = arith.subf %107, %77 : vector<8x128xf32>
    %109 = arith.mulf %108, %64 : vector<8x128xf32>
    %110 = arith.addf %106, %109 : vector<8x128xf32>
    %cst_33 = arith.constant 1.000000e+00 : f32
    %111 = vector.broadcast %cst_33 : f32 to vector<8x128xf32>
    %112 = arith.mulf %110, %111 : vector<8x128xf32>
    %113 = arith.mulf %79, %64 : vector<8x128xf32>
    %cst_34 = arith.constant 2.000000e+00 : f32
    %114 = vector.broadcast %cst_34 : f32 to vector<8x128xf32>
    %115 = arith.subf %114, %79 : vector<8x128xf32>
    %116 = arith.mulf %115, %65 : vector<8x128xf32>
    %117 = arith.addf %113, %116 : vector<8x128xf32>
    %cst_35 = arith.constant 1.000000e+00 : f32
    %118 = vector.broadcast %cst_35 : f32 to vector<8x128xf32>
    %119 = arith.mulf %117, %118 : vector<8x128xf32>
    %120 = arith.mulf %81, %65 : vector<8x128xf32>
    %cst_36 = arith.constant 2.000000e+00 : f32
    %121 = vector.broadcast %cst_36 : f32 to vector<8x128xf32>
    %122 = arith.subf %121, %81 : vector<8x128xf32>
    %123 = arith.mulf %122, %66 : vector<8x128xf32>
    %124 = arith.addf %120, %123 : vector<8x128xf32>
    %cst_37 = arith.constant 1.000000e+00 : f32
    %125 = vector.broadcast %cst_37 : f32 to vector<8x128xf32>
    %126 = arith.mulf %124, %125 : vector<8x128xf32>
    %127 = arith.mulf %83, %66 : vector<8x128xf32>
    %cst_38 = arith.constant 2.000000e+00 : f32
    %128 = vector.broadcast %cst_38 : f32 to vector<8x128xf32>
    %129 = arith.subf %128, %83 : vector<8x128xf32>
    %130 = arith.mulf %129, %67 : vector<8x128xf32>
    %131 = arith.addf %127, %130 : vector<8x128xf32>
    %cst_39 = arith.constant 1.000000e+00 : f32
    %132 = vector.broadcast %cst_39 : f32 to vector<8x128xf32>
    %133 = arith.mulf %131, %132 : vector<8x128xf32>
    %134 = arith.mulf %85, %67 : vector<8x128xf32>
    %cst_40 = arith.constant 2.000000e+00 : f32
    %135 = vector.broadcast %cst_40 : f32 to vector<8x128xf32>
    %136 = arith.subf %135, %85 : vector<8x128xf32>
    %137 = arith.mulf %136, %68 : vector<8x128xf32>
    %138 = arith.addf %134, %137 : vector<8x128xf32>
    %cst_41 = arith.constant 1.000000e+00 : f32
    %139 = vector.broadcast %cst_41 : f32 to vector<8x128xf32>
    %140 = arith.mulf %138, %139 : vector<8x128xf32>
    %141 = arith.mulf %87, %68 : vector<8x128xf32>
    %cst_42 = arith.constant 2.000000e+00 : f32
    %142 = vector.broadcast %cst_42 : f32 to vector<8x128xf32>
    %143 = arith.subf %142, %87 : vector<8x128xf32>
    %144 = arith.mulf %143, %69 : vector<8x128xf32>
    %145 = arith.addf %141, %144 : vector<8x128xf32>
    %cst_43 = arith.constant 1.000000e+00 : f32
    %146 = vector.broadcast %cst_43 : f32 to vector<8x128xf32>
    %147 = arith.mulf %145, %146 : vector<8x128xf32>
    %148 = arith.mulf %89, %69 : vector<8x128xf32>
    %cst_44 = arith.constant 2.000000e+00 : f32
    %149 = vector.broadcast %cst_44 : f32 to vector<8x128xf32>
    %150 = arith.subf %149, %89 : vector<8x128xf32>
    %151 = arith.mulf %150, %70 : vector<8x128xf32>
    %152 = arith.addf %148, %151 : vector<8x128xf32>
    %cst_45 = arith.constant 1.000000e+00 : f32
    %153 = vector.broadcast %cst_45 : f32 to vector<8x128xf32>
    %154 = arith.mulf %152, %153 : vector<8x128xf32>
    %155 = arith.mulf %91, %70 : vector<8x128xf32>
    %cst_46 = arith.constant 2.000000e+00 : f32
    %156 = vector.broadcast %cst_46 : f32 to vector<8x128xf32>
    %157 = arith.subf %156, %91 : vector<8x128xf32>
    %158 = arith.mulf %157, %71 : vector<8x128xf32>
    %159 = arith.addf %155, %158 : vector<8x128xf32>
    %cst_47 = arith.constant 1.000000e+00 : f32
    %160 = vector.broadcast %cst_47 : f32 to vector<8x128xf32>
    %161 = arith.mulf %159, %160 : vector<8x128xf32>
    %162 = arith.mulf %73, %98 : vector<8x128xf32>
    %cst_48 = arith.constant 3.000000e+00 : f32
    %163 = vector.broadcast %cst_48 : f32 to vector<8x128xf32>
    %164 = arith.subf %163, %73 : vector<8x128xf32>
    %165 = arith.mulf %164, %105 : vector<8x128xf32>
    %166 = arith.addf %162, %165 : vector<8x128xf32>
    %cst_49 = arith.constant 5.000000e-01 : f32
    %167 = vector.broadcast %cst_49 : f32 to vector<8x128xf32>
    %168 = arith.mulf %166, %167 : vector<8x128xf32>
    %169 = arith.mulf %75, %105 : vector<8x128xf32>
    %cst_50 = arith.constant 3.000000e+00 : f32
    %170 = vector.broadcast %cst_50 : f32 to vector<8x128xf32>
    %171 = arith.subf %170, %75 : vector<8x128xf32>
    %172 = arith.mulf %171, %112 : vector<8x128xf32>
    %173 = arith.addf %169, %172 : vector<8x128xf32>
    %cst_51 = arith.constant 5.000000e-01 : f32
    %174 = vector.broadcast %cst_51 : f32 to vector<8x128xf32>
    %175 = arith.mulf %173, %174 : vector<8x128xf32>
    %176 = arith.mulf %77, %112 : vector<8x128xf32>
    %cst_52 = arith.constant 3.000000e+00 : f32
    %177 = vector.broadcast %cst_52 : f32 to vector<8x128xf32>
    %178 = arith.subf %177, %77 : vector<8x128xf32>
    %179 = arith.mulf %178, %119 : vector<8x128xf32>
    %180 = arith.addf %176, %179 : vector<8x128xf32>
    %cst_53 = arith.constant 5.000000e-01 : f32
    %181 = vector.broadcast %cst_53 : f32 to vector<8x128xf32>
    %182 = arith.mulf %180, %181 : vector<8x128xf32>
    %183 = arith.mulf %79, %119 : vector<8x128xf32>
    %cst_54 = arith.constant 3.000000e+00 : f32
    %184 = vector.broadcast %cst_54 : f32 to vector<8x128xf32>
    %185 = arith.subf %184, %79 : vector<8x128xf32>
    %186 = arith.mulf %185, %126 : vector<8x128xf32>
    %187 = arith.addf %183, %186 : vector<8x128xf32>
    %cst_55 = arith.constant 5.000000e-01 : f32
    %188 = vector.broadcast %cst_55 : f32 to vector<8x128xf32>
    %189 = arith.mulf %187, %188 : vector<8x128xf32>
    %190 = arith.mulf %81, %126 : vector<8x128xf32>
    %cst_56 = arith.constant 3.000000e+00 : f32
    %191 = vector.broadcast %cst_56 : f32 to vector<8x128xf32>
    %192 = arith.subf %191, %81 : vector<8x128xf32>
    %193 = arith.mulf %192, %133 : vector<8x128xf32>
    %194 = arith.addf %190, %193 : vector<8x128xf32>
    %cst_57 = arith.constant 5.000000e-01 : f32
    %195 = vector.broadcast %cst_57 : f32 to vector<8x128xf32>
    %196 = arith.mulf %194, %195 : vector<8x128xf32>
    %197 = arith.mulf %83, %133 : vector<8x128xf32>
    %cst_58 = arith.constant 3.000000e+00 : f32
    %198 = vector.broadcast %cst_58 : f32 to vector<8x128xf32>
    %199 = arith.subf %198, %83 : vector<8x128xf32>
    %200 = arith.mulf %199, %140 : vector<8x128xf32>
    %201 = arith.addf %197, %200 : vector<8x128xf32>
    %cst_59 = arith.constant 5.000000e-01 : f32
    %202 = vector.broadcast %cst_59 : f32 to vector<8x128xf32>
    %203 = arith.mulf %201, %202 : vector<8x128xf32>
    %204 = arith.mulf %85, %140 : vector<8x128xf32>
    %cst_60 = arith.constant 3.000000e+00 : f32
    %205 = vector.broadcast %cst_60 : f32 to vector<8x128xf32>
    %206 = arith.subf %205, %85 : vector<8x128xf32>
    %207 = arith.mulf %206, %147 : vector<8x128xf32>
    %208 = arith.addf %204, %207 : vector<8x128xf32>
    %cst_61 = arith.constant 5.000000e-01 : f32
    %209 = vector.broadcast %cst_61 : f32 to vector<8x128xf32>
    %210 = arith.mulf %208, %209 : vector<8x128xf32>
    %211 = arith.mulf %87, %147 : vector<8x128xf32>
    %cst_62 = arith.constant 3.000000e+00 : f32
    %212 = vector.broadcast %cst_62 : f32 to vector<8x128xf32>
    %213 = arith.subf %212, %87 : vector<8x128xf32>
    %214 = arith.mulf %213, %154 : vector<8x128xf32>
    %215 = arith.addf %211, %214 : vector<8x128xf32>
    %cst_63 = arith.constant 5.000000e-01 : f32
    %216 = vector.broadcast %cst_63 : f32 to vector<8x128xf32>
    %217 = arith.mulf %215, %216 : vector<8x128xf32>
    %218 = arith.mulf %89, %154 : vector<8x128xf32>
    %cst_64 = arith.constant 3.000000e+00 : f32
    %219 = vector.broadcast %cst_64 : f32 to vector<8x128xf32>
    %220 = arith.subf %219, %89 : vector<8x128xf32>
    %221 = arith.mulf %220, %161 : vector<8x128xf32>
    %222 = arith.addf %218, %221 : vector<8x128xf32>
    %cst_65 = arith.constant 5.000000e-01 : f32
    %223 = vector.broadcast %cst_65 : f32 to vector<8x128xf32>
    %224 = arith.mulf %222, %223 : vector<8x128xf32>
    %225 = arith.mulf %73, %168 : vector<8x128xf32>
    %cst_66 = arith.constant 4.000000e+00 : f32
    %226 = vector.broadcast %cst_66 : f32 to vector<8x128xf32>
    %227 = arith.subf %226, %73 : vector<8x128xf32>
    %228 = arith.mulf %227, %175 : vector<8x128xf32>
    %229 = arith.addf %225, %228 : vector<8x128xf32>
    %cst_67 = arith.constant 0.333333343 : f32
    %230 = vector.broadcast %cst_67 : f32 to vector<8x128xf32>
    %231 = arith.mulf %229, %230 : vector<8x128xf32>
    %232 = arith.mulf %75, %175 : vector<8x128xf32>
    %cst_68 = arith.constant 4.000000e+00 : f32
    %233 = vector.broadcast %cst_68 : f32 to vector<8x128xf32>
    %234 = arith.subf %233, %75 : vector<8x128xf32>
    %235 = arith.mulf %234, %182 : vector<8x128xf32>
    %236 = arith.addf %232, %235 : vector<8x128xf32>
    %cst_69 = arith.constant 0.333333343 : f32
    %237 = vector.broadcast %cst_69 : f32 to vector<8x128xf32>
    %238 = arith.mulf %236, %237 : vector<8x128xf32>
    %239 = arith.mulf %77, %182 : vector<8x128xf32>
    %cst_70 = arith.constant 4.000000e+00 : f32
    %240 = vector.broadcast %cst_70 : f32 to vector<8x128xf32>
    %241 = arith.subf %240, %77 : vector<8x128xf32>
    %242 = arith.mulf %241, %189 : vector<8x128xf32>
    %243 = arith.addf %239, %242 : vector<8x128xf32>
    %cst_71 = arith.constant 0.333333343 : f32
    %244 = vector.broadcast %cst_71 : f32 to vector<8x128xf32>
    %245 = arith.mulf %243, %244 : vector<8x128xf32>
    %246 = arith.mulf %79, %189 : vector<8x128xf32>
    %cst_72 = arith.constant 4.000000e+00 : f32
    %247 = vector.broadcast %cst_72 : f32 to vector<8x128xf32>
    %248 = arith.subf %247, %79 : vector<8x128xf32>
    %249 = arith.mulf %248, %196 : vector<8x128xf32>
    %250 = arith.addf %246, %249 : vector<8x128xf32>
    %cst_73 = arith.constant 0.333333343 : f32
    %251 = vector.broadcast %cst_73 : f32 to vector<8x128xf32>
    %252 = arith.mulf %250, %251 : vector<8x128xf32>
    %253 = arith.mulf %81, %196 : vector<8x128xf32>
    %cst_74 = arith.constant 4.000000e+00 : f32
    %254 = vector.broadcast %cst_74 : f32 to vector<8x128xf32>
    %255 = arith.subf %254, %81 : vector<8x128xf32>
    %256 = arith.mulf %255, %203 : vector<8x128xf32>
    %257 = arith.addf %253, %256 : vector<8x128xf32>
    %cst_75 = arith.constant 0.333333343 : f32
    %258 = vector.broadcast %cst_75 : f32 to vector<8x128xf32>
    %259 = arith.mulf %257, %258 : vector<8x128xf32>
    %260 = arith.mulf %83, %203 : vector<8x128xf32>
    %cst_76 = arith.constant 4.000000e+00 : f32
    %261 = vector.broadcast %cst_76 : f32 to vector<8x128xf32>
    %262 = arith.subf %261, %83 : vector<8x128xf32>
    %263 = arith.mulf %262, %210 : vector<8x128xf32>
    %264 = arith.addf %260, %263 : vector<8x128xf32>
    %cst_77 = arith.constant 0.333333343 : f32
    %265 = vector.broadcast %cst_77 : f32 to vector<8x128xf32>
    %266 = arith.mulf %264, %265 : vector<8x128xf32>
    %267 = arith.mulf %85, %210 : vector<8x128xf32>
    %cst_78 = arith.constant 4.000000e+00 : f32
    %268 = vector.broadcast %cst_78 : f32 to vector<8x128xf32>
    %269 = arith.subf %268, %85 : vector<8x128xf32>
    %270 = arith.mulf %269, %217 : vector<8x128xf32>
    %271 = arith.addf %267, %270 : vector<8x128xf32>
    %cst_79 = arith.constant 0.333333343 : f32
    %272 = vector.broadcast %cst_79 : f32 to vector<8x128xf32>
    %273 = arith.mulf %271, %272 : vector<8x128xf32>
    %274 = arith.mulf %87, %217 : vector<8x128xf32>
    %cst_80 = arith.constant 4.000000e+00 : f32
    %275 = vector.broadcast %cst_80 : f32 to vector<8x128xf32>
    %276 = arith.subf %275, %87 : vector<8x128xf32>
    %277 = arith.mulf %276, %224 : vector<8x128xf32>
    %278 = arith.addf %274, %277 : vector<8x128xf32>
    %cst_81 = arith.constant 0.333333343 : f32
    %279 = vector.broadcast %cst_81 : f32 to vector<8x128xf32>
    %280 = arith.mulf %278, %279 : vector<8x128xf32>
    %281 = tpu.concatenate %8, %231, %238, %245, %252, %259, %266, %273, %280 in 0 : vector<8x128xf32>, vector<8x128xf32>, vector<8x128xf32>, vector<8x128xf32>, vector<8x128xf32>, vector<8x128xf32>, vector<8x128xf32>, vector<8x128xf32>, vector<8x128xf32> -> vector<72x128xf32>
    %cst_82 = arith.constant dense<0.000000e+00> : vector<32x128xf32>
    %282 = tpu.matmul %1, %281, %cst_82 {dimension_numbers = #tpu.dot_dimension_numbers<[1], [0], [0], [1], [0, 0, 1, 1], [], []>} : vector<32x72xf32>, vector<72x128xf32>, vector<32x128xf32> -> vector<32x128xf32>
    %283 = math.tanh %282 : vector<32x128xf32>
    %c0_83 = arith.constant 0 : index
    %c0_84 = arith.constant 0 : index
    %284 = vector.load %arg3[%c0_83, %c0_84] : memref<16x288xf32, #tpu.memory_space<vmem>>, vector<16x288xf32>
    %cst_85 = arith.constant 0.000000e+00 : f32
    %285 = vector.broadcast %cst_85 : f32 to vector<32x128xf32>
    %286 = arith.subf %285, %283 : vector<32x128xf32>
    %287 = math.exp %286 : vector<32x128xf32>
    %cst_86 = arith.constant 1.000000e+00 : f32
    %288 = vector.broadcast %cst_86 : f32 to vector<32x128xf32>
    %289 = arith.addf %288, %287 : vector<32x128xf32>
    %290 = tpu.reciprocal %289 {approx = true} : vector<32x128xf32> -> vector<32x128xf32>
    %291 = arith.mulf %283, %290 : vector<32x128xf32>
    %cst_87 = arith.constant -2.200000e+00 : f32
    %292 = vector.broadcast %cst_87 : f32 to vector<32x128xf32>
    %293 = arith.subf %283, %292 : vector<32x128xf32>
    %cst_88 = arith.constant 2.500000e+00 : f32
    %294 = vector.broadcast %cst_88 : f32 to vector<32x128xf32>
    %295 = arith.mulf %293, %294 : vector<32x128xf32>
    %cst_89 = arith.constant 0.000000e+00 : f32
    %296 = vector.broadcast %cst_89 : f32 to vector<32x128xf32>
    %297 = arith.cmpf oge, %295, %296 : vector<32x128xf32>
    %298 = arith.extui %297 : vector<32x128xi1> to vector<32x128xi32>
    %299 = arith.sitofp %298 : vector<32x128xi32> to vector<32x128xf32>
    %cst_90 = arith.constant 1.000000e+00 : f32
    %300 = vector.broadcast %cst_90 : f32 to vector<32x128xf32>
    %301 = arith.cmpf oge, %295, %300 : vector<32x128xf32>
    %302 = arith.extui %301 : vector<32x128xi1> to vector<32x128xi32>
    %303 = arith.sitofp %302 : vector<32x128xi32> to vector<32x128xf32>
    %cst_91 = arith.constant 2.000000e+00 : f32
    %304 = vector.broadcast %cst_91 : f32 to vector<32x128xf32>
    %305 = arith.cmpf oge, %295, %304 : vector<32x128xf32>
    %306 = arith.extui %305 : vector<32x128xi1> to vector<32x128xi32>
    %307 = arith.sitofp %306 : vector<32x128xi32> to vector<32x128xf32>
    %cst_92 = arith.constant 3.000000e+00 : f32
    %308 = vector.broadcast %cst_92 : f32 to vector<32x128xf32>
    %309 = arith.cmpf oge, %295, %308 : vector<32x128xf32>
    %310 = arith.extui %309 : vector<32x128xi1> to vector<32x128xi32>
    %311 = arith.sitofp %310 : vector<32x128xi32> to vector<32x128xf32>
    %cst_93 = arith.constant 4.000000e+00 : f32
    %312 = vector.broadcast %cst_93 : f32 to vector<32x128xf32>
    %313 = arith.cmpf oge, %295, %312 : vector<32x128xf32>
    %314 = arith.extui %313 : vector<32x128xi1> to vector<32x128xi32>
    %315 = arith.sitofp %314 : vector<32x128xi32> to vector<32x128xf32>
    %cst_94 = arith.constant 5.000000e+00 : f32
    %316 = vector.broadcast %cst_94 : f32 to vector<32x128xf32>
    %317 = arith.cmpf oge, %295, %316 : vector<32x128xf32>
    %318 = arith.extui %317 : vector<32x128xi1> to vector<32x128xi32>
    %319 = arith.sitofp %318 : vector<32x128xi32> to vector<32x128xf32>
    %cst_95 = arith.constant 6.000000e+00 : f32
    %320 = vector.broadcast %cst_95 : f32 to vector<32x128xf32>
    %321 = arith.cmpf oge, %295, %320 : vector<32x128xf32>
    %322 = arith.extui %321 : vector<32x128xi1> to vector<32x128xi32>
    %323 = arith.sitofp %322 : vector<32x128xi32> to vector<32x128xf32>
    %cst_96 = arith.constant 7.000000e+00 : f32
    %324 = vector.broadcast %cst_96 : f32 to vector<32x128xf32>
    %325 = arith.cmpf oge, %295, %324 : vector<32x128xf32>
    %326 = arith.extui %325 : vector<32x128xi1> to vector<32x128xi32>
    %327 = arith.sitofp %326 : vector<32x128xi32> to vector<32x128xf32>
    %cst_97 = arith.constant 8.000000e+00 : f32
    %328 = vector.broadcast %cst_97 : f32 to vector<32x128xf32>
    %329 = arith.cmpf oge, %295, %328 : vector<32x128xf32>
    %330 = arith.extui %329 : vector<32x128xi1> to vector<32x128xi32>
    %331 = arith.sitofp %330 : vector<32x128xi32> to vector<32x128xf32>
    %cst_98 = arith.constant 9.000000e+00 : f32
    %332 = vector.broadcast %cst_98 : f32 to vector<32x128xf32>
    %333 = arith.cmpf oge, %295, %332 : vector<32x128xf32>
    %334 = arith.extui %333 : vector<32x128xi1> to vector<32x128xi32>
    %335 = arith.sitofp %334 : vector<32x128xi32> to vector<32x128xf32>
    %cst_99 = arith.constant 1.000000e+01 : f32
    %336 = vector.broadcast %cst_99 : f32 to vector<32x128xf32>
    %337 = arith.cmpf oge, %295, %336 : vector<32x128xf32>
    %338 = arith.extui %337 : vector<32x128xi1> to vector<32x128xi32>
    %339 = arith.sitofp %338 : vector<32x128xi32> to vector<32x128xf32>
    %cst_100 = arith.constant 1.100000e+01 : f32
    %340 = vector.broadcast %cst_100 : f32 to vector<32x128xf32>
    %341 = arith.cmpf oge, %295, %340 : vector<32x128xf32>
    %342 = arith.extui %341 : vector<32x128xi1> to vector<32x128xi32>
    %343 = arith.sitofp %342 : vector<32x128xi32> to vector<32x128xf32>
    %344 = arith.subf %299, %303 : vector<32x128xf32>
    %345 = arith.subf %303, %307 : vector<32x128xf32>
    %346 = arith.subf %307, %311 : vector<32x128xf32>
    %347 = arith.subf %311, %315 : vector<32x128xf32>
    %348 = arith.subf %315, %319 : vector<32x128xf32>
    %349 = arith.subf %319, %323 : vector<32x128xf32>
    %350 = arith.subf %323, %327 : vector<32x128xf32>
    %351 = arith.subf %327, %331 : vector<32x128xf32>
    %352 = arith.subf %331, %335 : vector<32x128xf32>
    %353 = arith.subf %335, %339 : vector<32x128xf32>
    %354 = arith.subf %339, %343 : vector<32x128xf32>
    %cst_101 = arith.constant 0.000000e+00 : f32
    %355 = vector.broadcast %cst_101 : f32 to vector<32x128xf32>
    %356 = arith.subf %295, %355 : vector<32x128xf32>
    %cst_102 = arith.constant 1.000000e+00 : f32
    %357 = vector.broadcast %cst_102 : f32 to vector<32x128xf32>
    %358 = arith.subf %295, %357 : vector<32x128xf32>
    %cst_103 = arith.constant 2.000000e+00 : f32
    %359 = vector.broadcast %cst_103 : f32 to vector<32x128xf32>
    %360 = arith.subf %295, %359 : vector<32x128xf32>
    %cst_104 = arith.constant 3.000000e+00 : f32
    %361 = vector.broadcast %cst_104 : f32 to vector<32x128xf32>
    %362 = arith.subf %295, %361 : vector<32x128xf32>
    %cst_105 = arith.constant 4.000000e+00 : f32
    %363 = vector.broadcast %cst_105 : f32 to vector<32x128xf32>
    %364 = arith.subf %295, %363 : vector<32x128xf32>
    %cst_106 = arith.constant 5.000000e+00 : f32
    %365 = vector.broadcast %cst_106 : f32 to vector<32x128xf32>
    %366 = arith.subf %295, %365 : vector<32x128xf32>
    %cst_107 = arith.constant 6.000000e+00 : f32
    %367 = vector.broadcast %cst_107 : f32 to vector<32x128xf32>
    %368 = arith.subf %295, %367 : vector<32x128xf32>
    %cst_108 = arith.constant 7.000000e+00 : f32
    %369 = vector.broadcast %cst_108 : f32 to vector<32x128xf32>
    %370 = arith.subf %295, %369 : vector<32x128xf32>
    %cst_109 = arith.constant 8.000000e+00 : f32
    %371 = vector.broadcast %cst_109 : f32 to vector<32x128xf32>
    %372 = arith.subf %295, %371 : vector<32x128xf32>
    %cst_110 = arith.constant 9.000000e+00 : f32
    %373 = vector.broadcast %cst_110 : f32 to vector<32x128xf32>
    %374 = arith.subf %295, %373 : vector<32x128xf32>
    %375 = arith.mulf %356, %344 : vector<32x128xf32>
    %cst_111 = arith.constant 2.000000e+00 : f32
    %376 = vector.broadcast %cst_111 : f32 to vector<32x128xf32>
    %377 = arith.subf %376, %356 : vector<32x128xf32>
    %378 = arith.mulf %377, %345 : vector<32x128xf32>
    %379 = arith.addf %375, %378 : vector<32x128xf32>
    %cst_112 = arith.constant 1.000000e+00 : f32
    %380 = vector.broadcast %cst_112 : f32 to vector<32x128xf32>
    %381 = arith.mulf %379, %380 : vector<32x128xf32>
    %382 = arith.mulf %358, %345 : vector<32x128xf32>
    %cst_113 = arith.constant 2.000000e+00 : f32
    %383 = vector.broadcast %cst_113 : f32 to vector<32x128xf32>
    %384 = arith.subf %383, %358 : vector<32x128xf32>
    %385 = arith.mulf %384, %346 : vector<32x128xf32>
    %386 = arith.addf %382, %385 : vector<32x128xf32>
    %cst_114 = arith.constant 1.000000e+00 : f32
    %387 = vector.broadcast %cst_114 : f32 to vector<32x128xf32>
    %388 = arith.mulf %386, %387 : vector<32x128xf32>
    %389 = arith.mulf %360, %346 : vector<32x128xf32>
    %cst_115 = arith.constant 2.000000e+00 : f32
    %390 = vector.broadcast %cst_115 : f32 to vector<32x128xf32>
    %391 = arith.subf %390, %360 : vector<32x128xf32>
    %392 = arith.mulf %391, %347 : vector<32x128xf32>
    %393 = arith.addf %389, %392 : vector<32x128xf32>
    %cst_116 = arith.constant 1.000000e+00 : f32
    %394 = vector.broadcast %cst_116 : f32 to vector<32x128xf32>
    %395 = arith.mulf %393, %394 : vector<32x128xf32>
    %396 = arith.mulf %362, %347 : vector<32x128xf32>
    %cst_117 = arith.constant 2.000000e+00 : f32
    %397 = vector.broadcast %cst_117 : f32 to vector<32x128xf32>
    %398 = arith.subf %397, %362 : vector<32x128xf32>
    %399 = arith.mulf %398, %348 : vector<32x128xf32>
    %400 = arith.addf %396, %399 : vector<32x128xf32>
    %cst_118 = arith.constant 1.000000e+00 : f32
    %401 = vector.broadcast %cst_118 : f32 to vector<32x128xf32>
    %402 = arith.mulf %400, %401 : vector<32x128xf32>
    %403 = arith.mulf %364, %348 : vector<32x128xf32>
    %cst_119 = arith.constant 2.000000e+00 : f32
    %404 = vector.broadcast %cst_119 : f32 to vector<32x128xf32>
    %405 = arith.subf %404, %364 : vector<32x128xf32>
    %406 = arith.mulf %405, %349 : vector<32x128xf32>
    %407 = arith.addf %403, %406 : vector<32x128xf32>
    %cst_120 = arith.constant 1.000000e+00 : f32
    %408 = vector.broadcast %cst_120 : f32 to vector<32x128xf32>
    %409 = arith.mulf %407, %408 : vector<32x128xf32>
    %410 = arith.mulf %366, %349 : vector<32x128xf32>
    %cst_121 = arith.constant 2.000000e+00 : f32
    %411 = vector.broadcast %cst_121 : f32 to vector<32x128xf32>
    %412 = arith.subf %411, %366 : vector<32x128xf32>
    %413 = arith.mulf %412, %350 : vector<32x128xf32>
    %414 = arith.addf %410, %413 : vector<32x128xf32>
    %cst_122 = arith.constant 1.000000e+00 : f32
    %415 = vector.broadcast %cst_122 : f32 to vector<32x128xf32>
    %416 = arith.mulf %414, %415 : vector<32x128xf32>
    %417 = arith.mulf %368, %350 : vector<32x128xf32>
    %cst_123 = arith.constant 2.000000e+00 : f32
    %418 = vector.broadcast %cst_123 : f32 to vector<32x128xf32>
    %419 = arith.subf %418, %368 : vector<32x128xf32>
    %420 = arith.mulf %419, %351 : vector<32x128xf32>
    %421 = arith.addf %417, %420 : vector<32x128xf32>
    %cst_124 = arith.constant 1.000000e+00 : f32
    %422 = vector.broadcast %cst_124 : f32 to vector<32x128xf32>
    %423 = arith.mulf %421, %422 : vector<32x128xf32>
    %424 = arith.mulf %370, %351 : vector<32x128xf32>
    %cst_125 = arith.constant 2.000000e+00 : f32
    %425 = vector.broadcast %cst_125 : f32 to vector<32x128xf32>
    %426 = arith.subf %425, %370 : vector<32x128xf32>
    %427 = arith.mulf %426, %352 : vector<32x128xf32>
    %428 = arith.addf %424, %427 : vector<32x128xf32>
    %cst_126 = arith.constant 1.000000e+00 : f32
    %429 = vector.broadcast %cst_126 : f32 to vector<32x128xf32>
    %430 = arith.mulf %428, %429 : vector<32x128xf32>
    %431 = arith.mulf %372, %352 : vector<32x128xf32>
    %cst_127 = arith.constant 2.000000e+00 : f32
    %432 = vector.broadcast %cst_127 : f32 to vector<32x128xf32>
    %433 = arith.subf %432, %372 : vector<32x128xf32>
    %434 = arith.mulf %433, %353 : vector<32x128xf32>
    %435 = arith.addf %431, %434 : vector<32x128xf32>
    %cst_128 = arith.constant 1.000000e+00 : f32
    %436 = vector.broadcast %cst_128 : f32 to vector<32x128xf32>
    %437 = arith.mulf %435, %436 : vector<32x128xf32>
    %438 = arith.mulf %374, %353 : vector<32x128xf32>
    %cst_129 = arith.constant 2.000000e+00 : f32
    %439 = vector.broadcast %cst_129 : f32 to vector<32x128xf32>
    %440 = arith.subf %439, %374 : vector<32x128xf32>
    %441 = arith.mulf %440, %354 : vector<32x128xf32>
    %442 = arith.addf %438, %441 : vector<32x128xf32>
    %cst_130 = arith.constant 1.000000e+00 : f32
    %443 = vector.broadcast %cst_130 : f32 to vector<32x128xf32>
    %444 = arith.mulf %442, %443 : vector<32x128xf32>
    %445 = arith.mulf %356, %381 : vector<32x128xf32>
    %cst_131 = arith.constant 3.000000e+00 : f32
    %446 = vector.broadcast %cst_131 : f32 to vector<32x128xf32>
    %447 = arith.subf %446, %356 : vector<32x128xf32>
    %448 = arith.mulf %447, %388 : vector<32x128xf32>
    %449 = arith.addf %445, %448 : vector<32x128xf32>
    %cst_132 = arith.constant 5.000000e-01 : f32
    %450 = vector.broadcast %cst_132 : f32 to vector<32x128xf32>
    %451 = arith.mulf %449, %450 : vector<32x128xf32>
    %452 = arith.mulf %358, %388 : vector<32x128xf32>
    %cst_133 = arith.constant 3.000000e+00 : f32
    %453 = vector.broadcast %cst_133 : f32 to vector<32x128xf32>
    %454 = arith.subf %453, %358 : vector<32x128xf32>
    %455 = arith.mulf %454, %395 : vector<32x128xf32>
    %456 = arith.addf %452, %455 : vector<32x128xf32>
    %cst_134 = arith.constant 5.000000e-01 : f32
    %457 = vector.broadcast %cst_134 : f32 to vector<32x128xf32>
    %458 = arith.mulf %456, %457 : vector<32x128xf32>
    %459 = arith.mulf %360, %395 : vector<32x128xf32>
    %cst_135 = arith.constant 3.000000e+00 : f32
    %460 = vector.broadcast %cst_135 : f32 to vector<32x128xf32>
    %461 = arith.subf %460, %360 : vector<32x128xf32>
    %462 = arith.mulf %461, %402 : vector<32x128xf32>
    %463 = arith.addf %459, %462 : vector<32x128xf32>
    %cst_136 = arith.constant 5.000000e-01 : f32
    %464 = vector.broadcast %cst_136 : f32 to vector<32x128xf32>
    %465 = arith.mulf %463, %464 : vector<32x128xf32>
    %466 = arith.mulf %362, %402 : vector<32x128xf32>
    %cst_137 = arith.constant 3.000000e+00 : f32
    %467 = vector.broadcast %cst_137 : f32 to vector<32x128xf32>
    %468 = arith.subf %467, %362 : vector<32x128xf32>
    %469 = arith.mulf %468, %409 : vector<32x128xf32>
    %470 = arith.addf %466, %469 : vector<32x128xf32>
    %cst_138 = arith.constant 5.000000e-01 : f32
    %471 = vector.broadcast %cst_138 : f32 to vector<32x128xf32>
    %472 = arith.mulf %470, %471 : vector<32x128xf32>
    %473 = arith.mulf %364, %409 : vector<32x128xf32>
    %cst_139 = arith.constant 3.000000e+00 : f32
    %474 = vector.broadcast %cst_139 : f32 to vector<32x128xf32>
    %475 = arith.subf %474, %364 : vector<32x128xf32>
    %476 = arith.mulf %475, %416 : vector<32x128xf32>
    %477 = arith.addf %473, %476 : vector<32x128xf32>
    %cst_140 = arith.constant 5.000000e-01 : f32
    %478 = vector.broadcast %cst_140 : f32 to vector<32x128xf32>
    %479 = arith.mulf %477, %478 : vector<32x128xf32>
    %480 = arith.mulf %366, %416 : vector<32x128xf32>
    %cst_141 = arith.constant 3.000000e+00 : f32
    %481 = vector.broadcast %cst_141 : f32 to vector<32x128xf32>
    %482 = arith.subf %481, %366 : vector<32x128xf32>
    %483 = arith.mulf %482, %423 : vector<32x128xf32>
    %484 = arith.addf %480, %483 : vector<32x128xf32>
    %cst_142 = arith.constant 5.000000e-01 : f32
    %485 = vector.broadcast %cst_142 : f32 to vector<32x128xf32>
    %486 = arith.mulf %484, %485 : vector<32x128xf32>
    %487 = arith.mulf %368, %423 : vector<32x128xf32>
    %cst_143 = arith.constant 3.000000e+00 : f32
    %488 = vector.broadcast %cst_143 : f32 to vector<32x128xf32>
    %489 = arith.subf %488, %368 : vector<32x128xf32>
    %490 = arith.mulf %489, %430 : vector<32x128xf32>
    %491 = arith.addf %487, %490 : vector<32x128xf32>
    %cst_144 = arith.constant 5.000000e-01 : f32
    %492 = vector.broadcast %cst_144 : f32 to vector<32x128xf32>
    %493 = arith.mulf %491, %492 : vector<32x128xf32>
    %494 = arith.mulf %370, %430 : vector<32x128xf32>
    %cst_145 = arith.constant 3.000000e+00 : f32
    %495 = vector.broadcast %cst_145 : f32 to vector<32x128xf32>
    %496 = arith.subf %495, %370 : vector<32x128xf32>
    %497 = arith.mulf %496, %437 : vector<32x128xf32>
    %498 = arith.addf %494, %497 : vector<32x128xf32>
    %cst_146 = arith.constant 5.000000e-01 : f32
    %499 = vector.broadcast %cst_146 : f32 to vector<32x128xf32>
    %500 = arith.mulf %498, %499 : vector<32x128xf32>
    %501 = arith.mulf %372, %437 : vector<32x128xf32>
    %cst_147 = arith.constant 3.000000e+00 : f32
    %502 = vector.broadcast %cst_147 : f32 to vector<32x128xf32>
    %503 = arith.subf %502, %372 : vector<32x128xf32>
    %504 = arith.mulf %503, %444 : vector<32x128xf32>
    %505 = arith.addf %501, %504 : vector<32x128xf32>
    %cst_148 = arith.constant 5.000000e-01 : f32
    %506 = vector.broadcast %cst_148 : f32 to vector<32x128xf32>
    %507 = arith.mulf %505, %506 : vector<32x128xf32>
    %508 = arith.mulf %356, %451 : vector<32x128xf32>
    %cst_149 = arith.constant 4.000000e+00 : f32
    %509 = vector.broadcast %cst_149 : f32 to vector<32x128xf32>
    %510 = arith.subf %509, %356 : vector<32x128xf32>
    %511 = arith.mulf %510, %458 : vector<32x128xf32>
    %512 = arith.addf %508, %511 : vector<32x128xf32>
    %cst_150 = arith.constant 0.333333343 : f32
    %513 = vector.broadcast %cst_150 : f32 to vector<32x128xf32>
    %514 = arith.mulf %512, %513 : vector<32x128xf32>
    %515 = arith.mulf %358, %458 : vector<32x128xf32>
    %cst_151 = arith.constant 4.000000e+00 : f32
    %516 = vector.broadcast %cst_151 : f32 to vector<32x128xf32>
    %517 = arith.subf %516, %358 : vector<32x128xf32>
    %518 = arith.mulf %517, %465 : vector<32x128xf32>
    %519 = arith.addf %515, %518 : vector<32x128xf32>
    %cst_152 = arith.constant 0.333333343 : f32
    %520 = vector.broadcast %cst_152 : f32 to vector<32x128xf32>
    %521 = arith.mulf %519, %520 : vector<32x128xf32>
    %522 = arith.mulf %360, %465 : vector<32x128xf32>
    %cst_153 = arith.constant 4.000000e+00 : f32
    %523 = vector.broadcast %cst_153 : f32 to vector<32x128xf32>
    %524 = arith.subf %523, %360 : vector<32x128xf32>
    %525 = arith.mulf %524, %472 : vector<32x128xf32>
    %526 = arith.addf %522, %525 : vector<32x128xf32>
    %cst_154 = arith.constant 0.333333343 : f32
    %527 = vector.broadcast %cst_154 : f32 to vector<32x128xf32>
    %528 = arith.mulf %526, %527 : vector<32x128xf32>
    %529 = arith.mulf %362, %472 : vector<32x128xf32>
    %cst_155 = arith.constant 4.000000e+00 : f32
    %530 = vector.broadcast %cst_155 : f32 to vector<32x128xf32>
    %531 = arith.subf %530, %362 : vector<32x128xf32>
    %532 = arith.mulf %531, %479 : vector<32x128xf32>
    %533 = arith.addf %529, %532 : vector<32x128xf32>
    %cst_156 = arith.constant 0.333333343 : f32
    %534 = vector.broadcast %cst_156 : f32 to vector<32x128xf32>
    %535 = arith.mulf %533, %534 : vector<32x128xf32>
    %536 = arith.mulf %364, %479 : vector<32x128xf32>
    %cst_157 = arith.constant 4.000000e+00 : f32
    %537 = vector.broadcast %cst_157 : f32 to vector<32x128xf32>
    %538 = arith.subf %537, %364 : vector<32x128xf32>
    %539 = arith.mulf %538, %486 : vector<32x128xf32>
    %540 = arith.addf %536, %539 : vector<32x128xf32>
    %cst_158 = arith.constant 0.333333343 : f32
    %541 = vector.broadcast %cst_158 : f32 to vector<32x128xf32>
    %542 = arith.mulf %540, %541 : vector<32x128xf32>
    %543 = arith.mulf %366, %486 : vector<32x128xf32>
    %cst_159 = arith.constant 4.000000e+00 : f32
    %544 = vector.broadcast %cst_159 : f32 to vector<32x128xf32>
    %545 = arith.subf %544, %366 : vector<32x128xf32>
    %546 = arith.mulf %545, %493 : vector<32x128xf32>
    %547 = arith.addf %543, %546 : vector<32x128xf32>
    %cst_160 = arith.constant 0.333333343 : f32
    %548 = vector.broadcast %cst_160 : f32 to vector<32x128xf32>
    %549 = arith.mulf %547, %548 : vector<32x128xf32>
    %550 = arith.mulf %368, %493 : vector<32x128xf32>
    %cst_161 = arith.constant 4.000000e+00 : f32
    %551 = vector.broadcast %cst_161 : f32 to vector<32x128xf32>
    %552 = arith.subf %551, %368 : vector<32x128xf32>
    %553 = arith.mulf %552, %500 : vector<32x128xf32>
    %554 = arith.addf %550, %553 : vector<32x128xf32>
    %cst_162 = arith.constant 0.333333343 : f32
    %555 = vector.broadcast %cst_162 : f32 to vector<32x128xf32>
    %556 = arith.mulf %554, %555 : vector<32x128xf32>
    %557 = arith.mulf %370, %500 : vector<32x128xf32>
    %cst_163 = arith.constant 4.000000e+00 : f32
    %558 = vector.broadcast %cst_163 : f32 to vector<32x128xf32>
    %559 = arith.subf %558, %370 : vector<32x128xf32>
    %560 = arith.mulf %559, %507 : vector<32x128xf32>
    %561 = arith.addf %557, %560 : vector<32x128xf32>
    %cst_164 = arith.constant 0.333333343 : f32
    %562 = vector.broadcast %cst_164 : f32 to vector<32x128xf32>
    %563 = arith.mulf %561, %562 : vector<32x128xf32>
    %564 = tpu.concatenate %291, %514, %521, %528, %535, %542, %549, %556, %563 in 0 : vector<32x128xf32>, vector<32x128xf32>, vector<32x128xf32>, vector<32x128xf32>, vector<32x128xf32>, vector<32x128xf32>, vector<32x128xf32>, vector<32x128xf32>, vector<32x128xf32> -> vector<288x128xf32>
    %cst_165 = arith.constant dense<0.000000e+00> : vector<16x128xf32>
    %565 = tpu.matmul %284, %564, %cst_165 {dimension_numbers = #tpu.dot_dimension_numbers<[1], [0], [0], [1], [0, 0, 1, 1], [], []>} : vector<16x288xf32>, vector<288x128xf32>, vector<16x128xf32> -> vector<16x128xf32>
    %c0_166 = arith.constant 0 : index
    %c0_167 = arith.constant 0 : index
    %566 = vector.load %arg4[%c0_166, %c0_167] : memref<16x128xf32, #tpu.memory_space<vmem>>, vector<16x128xf32>
    tpu.vector_store %arg4[%c0_166, %c0_167], %565 {strides = array<i32>} : memref<16x128xf32, #tpu.memory_space<vmem>>, vector<16x128xf32>,
    return
  }
  func.func @transform_0(%arg0: i32) -> (i32, i32) {
    %c0_i32 = arith.constant 0 : i32
    %c0_i32_0 = arith.constant 0 : i32
    return %c0_i32, %arg0 : i32, i32
  }
  func.func @transform_1(%arg0: i32) -> (i32, i32) {
    %c0_i32 = arith.constant 0 : i32
    %c0_i32_0 = arith.constant 0 : i32
    %c0_i32_1 = arith.constant 0 : i32
    return %c0_i32, %c0_i32_0 : i32, i32
  }
  func.func @transform_2(%arg0: i32) -> (i32, i32) {
    %c0_i32 = arith.constant 0 : i32
    %c0_i32_0 = arith.constant 0 : i32
    %c0_i32_1 = arith.constant 0 : i32
    return %c0_i32, %c0_i32_0 : i32, i32
  }
  func.func @transform_3(%arg0: i32) -> (i32, i32) {
    %c0_i32 = arith.constant 0 : i32
    %c0_i32_0 = arith.constant 0 : i32
    return %c0_i32, %arg0 : i32, i32
  }
}

</mosaic_0001>

<llo_original>
// kernel: kan_forward_pallas.1
$region0: #{kan_forward_pallas.1}
  #allocation0 [shape = 'u32[]', space=smem, size = 0x4, offset = 0x4, fixed_abs, tag = 'smem constant byte address 0x4 - core index']
  #allocation1 [shape = 'u32[72,128]{1,0:T(1,128)}', space=vmem, size = 0x9000, scoped, tag = 'internal scratch']
  %s0 = inlined_call_operand.vmem [shape: f32[8,256], index: 0, kind: input, shape index: {}]
  %s1 = inlined_call_operand.hbm [shape: f32[32,72], index: 1, kind: input, shape index: {}]
  %s2 = inlined_call_operand.hbm [shape: f32[16,288], index: 2, kind: input, shape index: {}]
  %s3 = inlined_call_operand.hbm [shape: f32[16,256], index: 3, kind: output, shape index: {}]
  %s4 = sld [smem:[#allocation0]]
  $region53: #{kan_forward_pallas.1} parent=0
    _
  %s6 = ssub.s32 1, %s4
  %s7 = scalar_select 0, %s6, %s4
  $region1: #{kan_forward_pallas.1} parent=0
    #allocation2 [shape = 'u8[16384]{0}', space=vmem, size = 0x4000, scoped, tag = 'input window, operand 1, single buffered']
    #allocation3 [shape = 's32[2]{0}', space=sflag, size = 0x8, scoped, tag = 'scoped memory for kan_forward_pallas.1']
    #allocation4 [shape = 's32[2]{0}', space=sflag, size = 0x8, scoped, tag = 'scoped memory for kan_forward_pallas.1']
    #allocation5 [shape = 'u8[24576]{0}', space=vmem, size = 0x6000, scoped, tag = 'input window, operand 2, single buffered']
    #allocation6 [shape = 's32[1]{0}', space=sflag, size = 0x4, scoped, tag = 'scoped memory for kan_forward_pallas.1']
    #allocation7 [shape = 'u8[16384]{0}', space=vmem, size = 0x4000, scoped, tag = 'output window, operand 0']
    %8 = vsyncpa [#allocation3], 0
    %9 = vsyncpa [#allocation6], 0
    %10 = vsyncpa [#allocation4], 0
    %s11 = scalar_lea.sflag [#allocation4], 1
    %12 = vsyncpa %s11, 0
    loop: start=0, step=1, limit=4
    $region2: #{kan_forward_pallas.1} parent=1 // loop_pre_header
      _
    $region3: #{kan_forward_pallas.1} parent=1 // loop_header
      %s14 = sphi 0, %s18
      %p15 = scmp.ge.s32.totalorder %s14, 4
      %s24 = sphi 0, %s26
      %s27 = sphi 0, %s24
      %s28 = sphi 0, %s27
      %s44 = sphi 0, %s28
      %s48 = sphi 0, %s48
      %s50 = sphi 0, %s48
      %s51 = sphi 0, %s50
      %s65 = sphi 0, %s51
      %s69 = sphi 0, %s69
      %s71 = sphi 0, %s69
      %s72 = sphi 0, %s71
      %s86 = sphi 0, %s72
      %s92 = sphi 0, %s94
      %s95 = sphi 0, %s92
      %s96 = sphi 0, %s95
      %s112 = sphi 0, %s96
    $region4: #{kan_forward_pallas.1} parent=1 // loop_header_branch
      %17 = sbr.rel (%p15) target = $region8
    $region5: #{kan_forward_pallas.1} parent=1 // loop_body
      %s19 = ssub.s32 %s14, 1
      %s20 = ssub.s32 %s14, 2
      %s21 = sadd.s32 %s14, 1
      %s22 = ssub.s32 %s14, %s21
      %p23 = scmp.eq.s32.totalorder %s22, 0
      %s25 = sadd.s32 %s24, 1
      %s26 = scalar_select %p23, %s24, %s25
      %p29 = pneg %p23
      %p30 = scmp.eq.s32.totalorder %s14, 1
      %p31 = por %p29, %p30
      %p32 = scmp.ne.s32.totalorder %s24, %s27
      %p33 = scmp.eq.s32.totalorder %s14, 0
      %p34 = por %p32, %p33
      %p35 = scmp.ne.s32.totalorder %s24, %s27
      %p36 = scmp.eq.s32.totalorder %s19, 1
      %p37 = por %p35, %p36
      %p38 = scmp.ne.s32.totalorder %s27, %s28
      %p39 = scmp.eq.s32.totalorder %s19, 0
      %p40 = por %p38, %p39
      %p41 = scmp.ne.s32.totalorder %s27, %s28
      %p42 = scmp.eq.s32.totalorder %s20, 1
      %p43 = por %p41, %p42
      %p45 = scmp.ne.s32.totalorder %s28, %s44
      %p46 = scmp.eq.s32.totalorder %s20, 0
      %p47 = por %p45, %p46
      %s49 = sadd.s32 %s48, 1
      %p52 = scmp.eq.s32.totalorder %s14, 1
      %p53 = scmp.ne.s32.totalorder %s48, %s50
      %p54 = scmp.eq.s32.totalorder %s14, 0
      %p55 = por %p53, %p54
      %p56 = scmp.ne.s32.totalorder %s48, %s50
      %p57 = scmp.eq.s32.totalorder %s19, 1
      %p58 = por %p56, %p57
      %p59 = scmp.ne.s32.totalorder %s50, %s51
      %p60 = scmp.eq.s32.totalorder %s19, 0
      %p61 = por %p59, %p60
      %p62 = scmp.ne.s32.totalorder %s50, %s51
      %p63 = scmp.eq.s32.totalorder %s20, 1
      %p64 = por %p62, %p63
      %p66 = scmp.ne.s32.totalorder %s51, %s65
      %p67 = scmp.eq.s32.totalorder %s20, 0
      %p68 = por %p66, %p67
      %s70 = sadd.s32 %s69, 1
      %p73 = scmp.eq.s32.totalorder %s14, 1
      %p74 = scmp.ne.s32.totalorder %s69, %s71
      %p75 = scmp.eq.s32.totalorder %s14, 0
      %p76 = por %p74, %p75
      %p77 = scmp.ne.s32.totalorder %s69, %s71
      %p78 = scmp.eq.s32.totalorder %s19, 1
      %p79 = por %p77, %p78
      %p80 = scmp.ne.s32.totalorder %s71, %s72
      %p81 = scmp.eq.s32.totalorder %s19, 0
      %p82 = por %p80, %p81
      %p83 = scmp.ne.s32.totalorder %s71, %s72
      %p84 = scmp.eq.s32.totalorder %s20, 1
      %p85 = por %p83, %p84
      %p87 = scmp.ne.s32.totalorder %s72, %s86
      %p88 = scmp.eq.s32.totalorder %s20, 0
      %p89 = por %p87, %p88
      %s90 = ssub.s32 %s14, %s21
      %p91 = scmp.eq.s32.totalorder %s90, 0
      %s93 = sadd.s32 %s92, 1
      %s94 = scalar_select %p91, %s92, %s93
      %p97 = pneg %p91
      %p98 = scmp.eq.s32.totalorder %s14, 1
      %p99 = por %p97, %p98
      %p100 = scmp.ne.s32.totalorder %s92, %s95
      %p101 = scmp.eq.s32.totalorder %s14, 0
      %p102 = por %p100, %p101
      %p103 = scmp.ne.s32.totalorder %s92, %s95
      %p104 = scmp.eq.s32.totalorder %s19, 1
      %p105 = por %p103, %p104
      %p106 = scmp.ne.s32.totalorder %s95, %s96
      %p107 = scmp.eq.s32.totalorder %s19, 0
      %p108 = por %p106, %p107
      %p109 = scmp.ne.s32.totalorder %s95, %s96
      %p110 = scmp.eq.s32.totalorder %s20, 1
      %p111 = por %p109, %p110
      %p113 = scmp.ne.s32.totalorder %s96, %s112
      %p114 = scmp.eq.s32.totalorder %s20, 0
      %p115 = por %p113, %p114
      %p116 = scmp.le.s32.totalorder 1, %s14
      %p117 = scmp.lt.s32.totalorder %s14, 3
      %p118 = pnand %p116, %p117
      %p119 = pneg %p118
      // Predicated region
      $region9: #{kan_forward_pallas.1} parent=5 // pred_check
        _
      $region10: #{kan_forward_pallas.1} parent=5 // pred_check_branch
        %121 = sbr.rel (%p118) target = $region12
      $region11: #{kan_forward_pallas.1} parent=5 // pred_region
        %s122 = ssub.s32 %s14, 1
        // Predicated region
        $region13: #{kan_forward_pallas.1} parent=11 // pred_check
          %p123 = pneg %p61
        $region14: #{kan_forward_pallas.1} parent=11 // pred_check_branch
          %125 = sbr.rel (%p123) target = $region16
        $region15: #{kan_forward_pallas.1} parent=11 // pred_region
          %127 = vsyncadd [#allocation3], 0
          %s128 = sshll.u32 %s1, 4
          %s129 = int_to_ptr.hbm [resolvable:$true] %s128
          %s130 = sshll.u32 [#allocation2], 4
          %s131 = int_to_ptr.vmem [resolvable:$true] %s130
          %136 = dma.hbm_to_vmem [thread:$0]  %s129, 512, %s131, [#allocation3], 128, 128, 8
        $region16: #{kan_forward_pallas.1} parent=11 // pred_fallthru
          _
        // Predicated region
        $region17: #{kan_forward_pallas.1} parent=11 // pred_check
          %p137 = pneg %p82
        $region18: #{kan_forward_pallas.1} parent=11 // pred_check_branch
          %139 = sbr.rel (%p137) target = $region20
        $region19: #{kan_forward_pallas.1} parent=11 // pred_region
          %141 = vsyncadd [#allocation6], 0
          %s142 = sshll.u32 %s2, 4
          %s143 = int_to_ptr.hbm [resolvable:$true] %s142
          %s144 = sshll.u32 [#allocation5], 4
          %s145 = int_to_ptr.vmem [resolvable:$true] %s144
          %150 = dma.hbm_to_vmem [thread:$0]  %s143, 768, %s145, [#allocation6], 384, 384, 24
        $region20: #{kan_forward_pallas.1} parent=11 // pred_fallthru
          _
      $region12: #{kan_forward_pallas.1} parent=5 // pred_fallthru
        _
      %p151 = scmp.lt.s32.totalorder %s14, 2
      // Predicated region
      $region21: #{kan_forward_pallas.1} parent=5 // pred_check
        %p152 = pneg %p151
      $region22: #{kan_forward_pallas.1} parent=5 // pred_check_branch
        %154 = sbr.rel (%p152) target = $region24
      $region23: #{kan_forward_pallas.1} parent=5 // pred_region
        // Predicated region
        $region25: #{kan_forward_pallas.1} parent=23 // pred_check
          %p155 = pneg %p34
        $region26: #{kan_forward_pallas.1} parent=23 // pred_check_branch
          %157 = sbr.rel (%p155) target = $region28
        $region27: #{kan_forward_pallas.1} parent=23 // pred_region
          %p158 = scmp.lt.s32.totalorder %s14, 1
          %s159 = scalar_select %p158, %s14, 1
          %s160 = smul.addr %s159, 8
          %s161 = scalar_lea.vmem %s0, %s160
        $region28: #{kan_forward_pallas.1} parent=23 // pred_fallthru
          _
      $region24: #{kan_forward_pallas.1} parent=5 // pred_fallthru
        _
      %p162 = scmp.le.s32.totalorder 1, %s14
      %p163 = scmp.lt.s32.totalorder %s14, 3
      %p164 = pnand %p162, %p163
      %p165 = pneg %p164
      // Predicated region
      $region29: #{kan_forward_pallas.1} parent=5 // pred_check
        _
      $region30: #{kan_forward_pallas.1} parent=5 // pred_check_branch
        %167 = sbr.rel (%p164) target = $region32
      $region31: #{kan_forward_pallas.1} parent=5 // pred_region
        %s168 = ssub.s32 %s14, 1
        // Predicated region
        $region33: #{kan_forward_pallas.1} parent=31 // pred_check
          %p169 = pneg %p61
        $region34: #{kan_forward_pallas.1} parent=31 // pred_check_branch
          %171 = sbr.rel (%p169) target = $region36
        $region35: #{kan_forward_pallas.1} parent=31 // pred_region
          %173 = dma.done [#allocation3], 512
        $region36: #{kan_forward_pallas.1} parent=31 // pred_fallthru
          _
        // Predicated region
        $region37: #{kan_forward_pallas.1} parent=31 // pred_check
          %p174 = pneg %p82
        $region38: #{kan_forward_pallas.1} parent=31 // pred_check_branch
          %176 = sbr.rel (%p174) target = $region40
        $region39: #{kan_forward_pallas.1} parent=31 // pred_region
          %178 = dma.done [#allocation6], 768
        $region40: #{kan_forward_pallas.1} parent=31 // pred_fallthru
          _
        %p179 = scmp.lt.s32.totalorder %s19, 1
        %s180 = scalar_select %p179, %s19, 1
        %s181 = smul.addr %s180, 8
        %s182 = scalar_lea.vmem %s0, %s181
        %p183 = pneg %p40
        %p184 = pneg %p37
        %p185 = pneg %p61
        %p186 = pneg %p58
        %p187 = pneg %p82
        %p188 = pneg %p79
        %p189 = pneg %p108
        %p190 = pneg %p105
        %s191 = sand.u32 %s95, 1
        %s192 = scalar_lea.sflag [#allocation4], %s191
        %s193 = sand.u32 %s95, 1
        %s194 = smul.addr %s193, 16
        %s195 = scalar_lea.vmem [#allocation7], %s194
        %p196 = scmp.lt.s32.totalorder %s19, 1
        %s197 = scalar_select %p196, %s19, 1
        %s198 = smul.addr %s197, 8
        %s199 = scalar_lea.vmem %s0, %s198
        %v200 = vld [vmem:[%s199] sm:$0xff]
        %v201 = vld [vmem:[#allocation2] sm:$0xff]
        %v202 = vld [vmem:[#allocation2 + $0x8] sm:$0xff]
        %v203 = vld [vmem:[#allocation2 + $0x10] sm:$0xff]
        %v204 = vld [vmem:[#allocation2 + $0x18] sm:$0xff]
        %v205 = vsub.f32 0.0, %v200
        %v206 = vmul.f32 %v205, 1.442695
        %v207 = vpow.pop %v206
        %v208 = vadd.f32 %v207, 1.0
        %v209 = vrcp.pop %v208
        %v210 = vmul.f32 %v200, %v209
        %v211 = vsub.f32 %v200, -2.2
        %v212 = vmul.f32 %v211, 2.5
        %vm213 = vcmp.ge.f32.partialorder %v212, 0.0
        %v214 = vsel %vm213, 1, 0
        %v215 = vcvt.s32.f32 %v214
        %vm216 = vcmp.ge.f32.partialorder %v212, 1.0
        %v217 = vsel %vm216, 1, 0
        %v218 = vcvt.s32.f32 %v217
        %vm219 = vcmp.ge.f32.partialorder %v212, 2.0
        %v220 = vsel %vm219, 1, 0
        %v221 = vcvt.s32.f32 %v220
        %vm222 = vcmp.ge.f32.partialorder %v212, 3.0
        %v223 = vsel %vm222, 1, 0
        %v224 = vcvt.s32.f32 %v223
        %vm225 = vcmp.ge.f32.partialorder %v212, 4.0
        %v226 = vsel %vm225, 1, 0
        %v227 = vcvt.s32.f32 %v226
        %vm228 = vcmp.ge.f32.partialorder %v212, 5.0
        %v229 = vsel %vm228, 1, 0
        %v230 = vcvt.s32.f32 %v229
        %vm231 = vcmp.ge.f32.partialorder %v212, 6.0
        %v232 = vsel %vm231, 1, 0
        %v233 = vcvt.s32.f32 %v232
        %vm234 = vcmp.ge.f32.partialorder %v212, 7.0
        %v235 = vsel %vm234, 1, 0
        %v236 = vcvt.s32.f32 %v235
        %vm237 = vcmp.ge.f32.partialorder %v212, 8.0
        %v238 = vsel %vm237, 1, 0
        %v239 = vcvt.s32.f32 %v238
        %vm240 = vcmp.ge.f32.partialorder %v212, 9.0
        %v241 = vsel %vm240, 1, 0
        %v242 = vcvt.s32.f32 %v241
        %vm243 = vcmp.ge.f32.partialorder %v212, 10.0
        %v244 = vsel %vm243, 1, 0
        %v245 = vcvt.s32.f32 %v244
        %vm246 = vcmp.ge.f32.partialorder %v212, 11.0
        %v247 = vsel %vm246, 1, 0
        %v248 = vcvt.s32.f32 %v247
        %v249 = vsub.f32 %v215, %v218
        %v250 = vsub.f32 %v218, %v221
        %v251 = vsub.f32 %v221, %v224
        %v252 = vsub.f32 %v224, %v227
        %v253 = vsub.f32 %v227, %v230
        %v254 = vsub.f32 %v230, %v233
        %v255 = vsub.f32 %v233, %v236
        %v256 = vsub.f32 %v236, %v239
        %v257 = vsub.f32 %v239, %v242
        %v258 = vsub.f32 %v242, %v245
        %v259 = vsub.f32 %v245, %v248
        %v260 = vsub.f32 %v212, 1.0
        %v261 = vsub.f32 %v212, 2.0
        %v262 = vsub.f32 %v212, 3.0
        %v263 = vsub.f32 %v212, 4.0
        %v264 = vsub.f32 %v212, 5.0
        %v265 = vsub.f32 %v212, 6.0
        %v266 = vsub.f32 %v212, 7.0
        %v267 = vsub.f32 %v212, 8.0
        %v268 = vsub.f32 %v212, 9.0
        %v269 = vmul.f32 %v212, %v249
        %v270 = vsub.f32 2.0, %v212
        %v271 = vmul.f32 %v270, %v250
        %v272 = vadd.f32 %v269, %v271
        %v273 = vmul.f32 %v260, %v250
        %v274 = vsub.f32 2.0, %v260
        %v275 = vmul.f32 %v274, %v251
        %v276 = vadd.f32 %v273, %v275
        %v277 = vmul.f32 %v261, %v251
        %v278 = vsub.f32 2.0, %v261
        %v279 = vmul.f32 %v278, %v252
        %v280 = vadd.f32 %v277, %v279
        %v281 = vmul.f32 %v262, %v252
        %v282 = vsub.f32 2.0, %v262
        %v283 = vmul.f32 %v282, %v253
        %v284 = vadd.f32 %v281, %v283
        %v285 = vmul.f32 %v263, %v253
        %v286 = vsub.f32 2.0, %v263
        %v287 = vmul.f32 %v286, %v254
        %v288 = vadd.f32 %v285, %v287
        %v289 = vmul.f32 %v264, %v254
        %v290 = vsub.f32 2.0, %v264
        %v291 = vmul.f32 %v290, %v255
        %v292 = vadd.f32 %v289, %v291
        %v293 = vmul.f32 %v265, %v255
        %v294 = vsub.f32 2.0, %v265
        %v295 = vmul.f32 %v294, %v256
        %v296 = vadd.f32 %v293, %v295
        %v297 = vmul.f32 %v266, %v256
        %v298 = vsub.f32 2.0, %v266
        %v299 = vmul.f32 %v298, %v257
        %v300 = vadd.f32 %v297, %v299
        %v301 = vmul.f32 %v267, %v257
        %v302 = vsub.f32 2.0, %v267
        %v303 = vmul.f32 %v302, %v258
        %v304 = vadd.f32 %v301, %v303
        %v305 = vmul.f32 %v268, %v258
        %v306 = vsub.f32 2.0, %v268
        %v307 = vmul.f32 %v306, %v259
        %v308 = vadd.f32 %v305, %v307
        %v309 = vmul.f32 %v212, %v272
        %v310 = vsub.f32 3.0, %v212
        %v311 = vmul.f32 %v310, %v276
        %v312 = vadd.f32 %v309, %v311
        %v313 = vmul.f32 %v312, 0.5
        %v314 = vmul.f32 %v260, %v276
        %v315 = vsub.f32 3.0, %v260
        %v316 = vmul.f32 %v315, %v280
        %v317 = vadd.f32 %v314, %v316
        %v318 = vmul.f32 %v317, 0.5
        %v319 = vmul.f32 %v261, %v280
        %v320 = vsub.f32 3.0, %v261
        %v321 = vmul.f32 %v320, %v284
        %v322 = vadd.f32 %v319, %v321
        %v323 = vmul.f32 %v322, 0.5
        %v324 = vmul.f32 %v262, %v284
        %v325 = vsub.f32 3.0, %v262
        %v326 = vmul.f32 %v325, %v288
        %v327 = vadd.f32 %v324, %v326
        %v328 = vmul.f32 %v327, 0.5
        %v329 = vmul.f32 %v263, %v288
        %v330 = vsub.f32 3.0, %v263
        %v331 = vmul.f32 %v330, %v292
        %v332 = vadd.f32 %v329, %v331
        %v333 = vmul.f32 %v332, 0.5
        %v334 = vmul.f32 %v264, %v292
        %v335 = vsub.f32 3.0, %v264
        %v336 = vmul.f32 %v335, %v296
        %v337 = vadd.f32 %v334, %v336
        %v338 = vmul.f32 %v337, 0.5
        %v339 = vmul.f32 %v265, %v296
        %v340 = vsub.f32 3.0, %v265
        %v341 = vmul.f32 %v340, %v300
        %v342 = vadd.f32 %v339, %v341
        %v343 = vmul.f32 %v342, 0.5
        %v344 = vmul.f32 %v266, %v300
        %v345 = vsub.f32 3.0, %v266
        %v346 = vmul.f32 %v345, %v304
        %v347 = vadd.f32 %v344, %v346
        %v348 = vmul.f32 %v347, 0.5
        %v349 = vmul.f32 %v267, %v304
        %v350 = vsub.f32 3.0, %v267
        %v351 = vmul.f32 %v350, %v308
        %v352 = vadd.f32 %v349, %v351
        %v353 = vmul.f32 %v352, 0.5
        %v354 = vmul.f32 %v212, %v313
        %v355 = vsub.f32 4.0, %v212
        %v356 = vmul.f32 %v355, %v318
        %v357 = vadd.f32 %v354, %v356
        %v358 = vmul.f32 %v357, 0.33333334
        %v359 = vmul.f32 %v260, %v318
        %v360 = vsub.f32 4.0, %v260
        %v361 = vmul.f32 %v360, %v323
        %v362 = vadd.f32 %v359, %v361
        %v363 = vmul.f32 %v362, 0.33333334
        %v364 = vmul.f32 %v261, %v323
        %v365 = vsub.f32 4.0, %v261
        %v366 = vmul.f32 %v365, %v328
        %v367 = vadd.f32 %v364, %v366
        %v368 = vmul.f32 %v367, 0.33333334
        %v369 = vmul.f32 %v262, %v328
        %v370 = vsub.f32 4.0, %v262
        %v371 = vmul.f32 %v370, %v333
        %v372 = vadd.f32 %v369, %v371
        %v373 = vmul.f32 %v372, 0.33333334
        %v374 = vmul.f32 %v263, %v333
        %v375 = vsub.f32 4.0, %v263
        %v376 = vmul.f32 %v375, %v338
        %v377 = vadd.f32 %v374, %v376
        %v378 = vmul.f32 %v377, 0.33333334
        %v379 = vmul.f32 %v264, %v338
        %v380 = vsub.f32 4.0, %v264
        %v381 = vmul.f32 %v380, %v343
        %v382 = vadd.f32 %v379, %v381
        %v383 = vmul.f32 %v382, 0.33333334
        %v384 = vmul.f32 %v265, %v343
        %v385 = vsub.f32 4.0, %v265
        %v386 = vmul.f32 %v385, %v348
        %v387 = vadd.f32 %v384, %v386
        %v388 = vmul.f32 %v387, 0.33333334
        %v389 = vmul.f32 %v266, %v348
        %v390 = vsub.f32 4.0, %v266
        %v391 = vmul.f32 %v390, %v353
        %v392 = vadd.f32 %v389, %v391
        %v393 = vmul.f32 %v392, 0.33333334
        %vm394 = vcmask 588800
        %v396 = vsel %vm394, %v201, 0
        %v399 = vsel %vm394, %v202, 0
        %v402 = vsel %vm394, %v203, 0
        %v405 = vsel %vm394, %v204, 0
        %407 = vmatpush.msra.mxu0 0.0
        %408 = vmatpush.msra.mxu0 0.0
        %409 = vmatpush.msra.mxu0 0.0
        %410 = vmatpush.msra.mxu0 0.0
        %411 = vmatpush.msra.mxu0 0.0
        %412 = vmatpush.msra.mxu0 0.0
        %413 = vmatpush.msra.mxu0 0.0
        %414 = vmatpush.msra.mxu0 %v393
        %415 = vmatpush.msra.mxu0 %v388
        %416 = vmatpush.msra.mxu0 %v383
        %417 = vmatpush.msra.mxu0 %v378
        %418 = vmatpush.msra.mxu0 %v373
        %419 = vmatpush.msra.mxu0 %v368
        %420 = vmatpush.msra.mxu0 %v363
        %421 = vmatpush.msra.mxu0 %v358
        %422 = vmatpush.msra.mxu0 %v210
        %423 = vmatmul.f32.gmra.mxu0 %v396
        %v424 = vpop.f32.mrf.mxu0
        %v425 = vadd.f32 0.0, %v424
        %426 = vmatmul.f32.gmra.mxu0 %v399
        %v427 = vpop.f32.mrf.mxu0
        %v428 = vadd.f32 0.0, %v427
        %429 = vmatmul.f32.gmra.mxu0 %v402
        %v430 = vpop.f32.mrf.mxu0
        %v431 = vadd.f32 0.0, %v430
        %432 = vmatmul.f32.gmra.mxu0 %v405
        %v433 = vpop.f32.mrf.mxu0
        %v434 = vadd.f32 0.0, %v433
        %435 = vdwg.mxu0
        %v436 = vtanh.pop %v425
        %v437 = vtanh.pop %v428
        %v438 = vtanh.pop %v431
        %v439 = vtanh.pop %v434
        %v440 = vld [vmem:[#allocation5] sm:$0xff]
        %v441 = vld [vmem:[#allocation5 + $0x8] sm:$0xff]
        %v442 = vld [vmem:[#allocation5 + $0x10] sm:$0xff]
        %v443 = vld [vmem:[#allocation5 + $0x18] sm:$0xff]
        %v444 = vld [vmem:[#allocation5 + $0x20] sm:$0xff]
        %v445 = vld [vmem:[#allocation5 + $0x28] sm:$0xff]
        %v446 = vsub.f32 0.0, %v436
        %v447 = vsub.f32 0.0, %v437
        %v448 = vsub.f32 0.0, %v438
        %v449 = vsub.f32 0.0, %v439
        %v450 = vmul.f32 %v446, 1.442695
        %v451 = vpow.pop %v450
        %v452 = vmul.f32 %v447, 1.442695
        %v453 = vpow.pop %v452
        %v454 = vmul.f32 %v448, 1.442695
        %v455 = vpow.pop %v454
        %v456 = vmul.f32 %v449, 1.442695
        %v457 = vpow.pop %v456
        %v458 = vadd.f32 %v451, 1.0
        %v459 = vadd.f32 %v453, 1.0
        %v460 = vadd.f32 %v455, 1.0
        %v461 = vadd.f32 %v457, 1.0
        %v462 = vrcp.pop %v458
        %v463 = vrcp.pop %v459
        %v464 = vrcp.pop %v460
        %v465 = vrcp.pop %v461
        %v466 = vmul.f32 %v436, %v462
        %v467 = vmul.f32 %v437, %v463
        %v468 = vmul.f32 %v438, %v464
        %v469 = vmul.f32 %v439, %v465
        %v470 = vsub.f32 %v436, -2.2
        %v471 = vsub.f32 %v437, -2.2
        %v472 = vsub.f32 %v438, -2.2
        %v473 = vsub.f32 %v439, -2.2
        %v474 = vmul.f32 %v470, 2.5
        %v475 = vmul.f32 %v471, 2.5
        %v476 = vmul.f32 %v472, 2.5
        %v477 = vmul.f32 %v473, 2.5
        %vm478 = vcmp.ge.f32.partialorder %v474, 0.0
        %vm479 = vcmp.ge.f32.partialorder %v475, 0.0
        %vm480 = vcmp.ge.f32.partialorder %v476, 0.0
        %vm481 = vcmp.ge.f32.partialorder %v477, 0.0
        %v482 = vsel %vm478, 1, 0
        %v483 = vsel %vm479, 1, 0
        %v484 = vsel %vm480, 1, 0
        %v485 = vsel %vm481, 1, 0
        %v486 = vcvt.s32.f32 %v482
        %v487 = vcvt.s32.f32 %v483
        %v488 = vcvt.s32.f32 %v484
        %v489 = vcvt.s32.f32 %v485
        %vm490 = vcmp.ge.f32.partialorder %v474, 1.0
        %vm491 = vcmp.ge.f32.partialorder %v475, 1.0
        %vm492 = vcmp.ge.f32.partialorder %v476, 1.0
        %vm493 = vcmp.ge.f32.partialorder %v477, 1.0
        %v494 = vsel %vm490, 1, 0
        %v495 = vsel %vm491, 1, 0
        %v496 = vsel %vm492, 1, 0
        %v497 = vsel %vm493, 1, 0
        %v498 = vcvt.s32.f32 %v494
        %v499 = vcvt.s32.f32 %v495
        %v500 = vcvt.s32.f32 %v496
        %v501 = vcvt.s32.f32 %v497
        %vm502 = vcmp.ge.f32.partialorder %v474, 2.0
        %vm503 = vcmp.ge.f32.partialorder %v475, 2.0
        %vm504 = vcmp.ge.f32.partialorder %v476, 2.0
        %vm505 = vcmp.ge.f32.partialorder %v477, 2.0
        %v506 = vsel %vm502, 1, 0
        %v507 = vsel %vm503, 1, 0
        %v508 = vsel %vm504, 1, 0
        %v509 = vsel %vm505, 1, 0
        %v510 = vcvt.s32.f32 %v506
        %v511 = vcvt.s32.f32 %v507
        %v512 = vcvt.s32.f32 %v508
        %v513 = vcvt.s32.f32 %v509
        %vm514 = vcmp.ge.f32.partialorder %v474, 3.0
        %vm515 = vcmp.ge.f32.partialorder %v475, 3.0
        %vm516 = vcmp.ge.f32.partialorder %v476, 3.0
        %vm517 = vcmp.ge.f32.partialorder %v477, 3.0
        %v518 = vsel %vm514, 1, 0
        %v519 = vsel %vm515, 1, 0
        %v520 = vsel %vm516, 1, 0
        %v521 = vsel %vm517, 1, 0
        %v522 = vcvt.s32.f32 %v518
        %v523 = vcvt.s32.f32 %v519
        %v524 = vcvt.s32.f32 %v520
        %v525 = vcvt.s32.f32 %v521
        %vm526 = vcmp.ge.f32.partialorder %v474, 4.0
        %vm527 = vcmp.ge.f32.partialorder %v475, 4.0
        %vm528 = vcmp.ge.f32.partialorder %v476, 4.0
        %vm529 = vcmp.ge.f32.partialorder %v477, 4.0
        %v530 = vsel %vm526, 1, 0
        %v531 = vsel %vm527, 1, 0
        %v532 = vsel %vm528, 1, 0
        %v533 = vsel %vm529, 1, 0
        %v534 = vcvt.s32.f32 %v530
        %v535 = vcvt.s32.f32 %v531
        %v536 = vcvt.s32.f32 %v532
        %v537 = vcvt.s32.f32 %v533
        %vm538 = vcmp.ge.f32.partialorder %v474, 5.0
        %vm539 = vcmp.ge.f32.partialorder %v475, 5.0
        %vm540 = vcmp.ge.f32.partialorder %v476, 5.0
        %vm541 = vcmp.ge.f32.partialorder %v477, 5.0
        %v542 = vsel %vm538, 1, 0
        %v543 = vsel %vm539, 1, 0
        %v544 = vsel %vm540, 1, 0
        %v545 = vsel %vm541, 1, 0
        %v546 = vcvt.s32.f32 %v542
        %v547 = vcvt.s32.f32 %v543
        %v548 = vcvt.s32.f32 %v544
        %v549 = vcvt.s32.f32 %v545
        %vm550 = vcmp.ge.f32.partialorder %v474, 6.0
        %vm551 = vcmp.ge.f32.partialorder %v475, 6.0
        %vm552 = vcmp.ge.f32.partialorder %v476, 6.0
        %vm553 = vcmp.ge.f32.partialorder %v477, 6.0
        %v554 = vsel %vm550, 1, 0
        %v555 = vsel %vm551, 1, 0
        %v556 = vsel %vm552, 1, 0
        %v557 = vsel %vm553, 1, 0
        %v558 = vcvt.s32.f32 %v554
        %v559 = vcvt.s32.f32 %v555
        %v560 = vcvt.s32.f32 %v556
        %v561 = vcvt.s32.f32 %v557
        %vm562 = vcmp.ge.f32.partialorder %v474, 7.0
        %vm563 = vcmp.ge.f32.partialorder %v475, 7.0
        %vm564 = vcmp.ge.f32.partialorder %v476, 7.0
        %vm565 = vcmp.ge.f32.partialorder %v477, 7.0
        %v566 = vsel %vm562, 1, 0
        %v567 = vsel %vm563, 1, 0
        %v568 = vsel %vm564, 1, 0
        %v569 = vsel %vm565, 1, 0
        %v570 = vcvt.s32.f32 %v566
        %v571 = vcvt.s32.f32 %v567
        %v572 = vcvt.s32.f32 %v568
        %v573 = vcvt.s32.f32 %v569
        %vm574 = vcmp.ge.f32.partialorder %v474, 8.0
        %vm575 = vcmp.ge.f32.partialorder %v475, 8.0
        %vm576 = vcmp.ge.f32.partialorder %v476, 8.0
        %vm577 = vcmp.ge.f32.partialorder %v477, 8.0
        %v578 = vsel %vm574, 1, 0
        %v579 = vsel %vm575, 1, 0
        %v580 = vsel %vm576, 1, 0
        %v581 = vsel %vm577, 1, 0
        %v582 = vcvt.s32.f32 %v578
        %v583 = vcvt.s32.f32 %v579
        %v584 = vcvt.s32.f32 %v580
        %v585 = vcvt.s32.f32 %v581
        %vm586 = vcmp.ge.f32.partialorder %v474, 9.0
        %vm587 = vcmp.ge.f32.partialorder %v475, 9.0
        %vm588 = vcmp.ge.f32.partialorder %v476, 9.0
        %vm589 = vcmp.ge.f32.partialorder %v477, 9.0
        %v590 = vsel %vm586, 1, 0
        %v591 = vsel %vm587, 1, 0
        %v592 = vsel %vm588, 1, 0
        %v593 = vsel %vm589, 1, 0
        %v594 = vcvt.s32.f32 %v590
        %v595 = vcvt.s32.f32 %v591
        %v596 = vcvt.s32.f32 %v592
        %v597 = vcvt.s32.f32 %v593
        %vm598 = vcmp.ge.f32.partialorder %v474, 10.0
        %vm599 = vcmp.ge.f32.partialorder %v475, 10.0
        %vm600 = vcmp.ge.f32.partialorder %v476, 10.0
        %vm601 = vcmp.ge.f32.partialorder %v477, 10.0
        %v602 = vsel %vm598, 1, 0
        %v603 = vsel %vm599, 1, 0
        %v604 = vsel %vm600, 1, 0
        %v605 = vsel %vm601, 1, 0
        %v606 = vcvt.s32.f32 %v602
        %v607 = vcvt.s32.f32 %v603
        %v608 = vcvt.s32.f32 %v604
        %v609 = vcvt.s32.f32 %v605
        %vm610 = vcmp.ge.f32.partialorder %v474, 11.0
        %vm611 = vcmp.ge.f32.partialorder %v475, 11.0
        %vm612 = vcmp.ge.f32.partialorder %v476, 11.0
        %vm613 = vcmp.ge.f32.partialorder %v477, 11.0
        %v614 = vsel %vm610, 1, 0
        %v615 = vsel %vm611, 1, 0
        %v616 = vsel %vm612, 1, 0
        %v617 = vsel %vm613, 1, 0
        %v618 = vcvt.s32.f32 %v614
        %v619 = vcvt.s32.f32 %v615
        %v620 = vcvt.s32.f32 %v616
        %v621 = vcvt.s32.f32 %v617
        %v622 = vsub.f32 %v486, %v498
        %v623 = vsub.f32 %v487, %v499
        %v624 = vsub.f32 %v488, %v500
        %v625 = vsub.f32 %v489, %v501
        %v626 = vsub.f32 %v498, %v510
        %v627 = vsub.f32 %v499, %v511
        %v628 = vsub.f32 %v500, %v512
        %v629 = vsub.f32 %v501, %v513
        %v630 = vsub.f32 %v510, %v522
        %v631 = vsub.f32 %v511, %v523
        %v632 = vsub.f32 %v512, %v524
        %v633 = vsub.f32 %v513, %v525
        %v634 = vsub.f32 %v522, %v534
        %v635 = vsub.f32 %v523, %v535
        %v636 = vsub.f32 %v524, %v536
        %v637 = vsub.f32 %v525, %v537
        %v638 = vsub.f32 %v534, %v546
        %v639 = vsub.f32 %v535, %v547
        %v640 = vsub.f32 %v536, %v548
        %v641 = vsub.f32 %v537, %v549
        %v642 = vsub.f32 %v546, %v558
        %v643 = vsub.f32 %v547, %v559
        %v644 = vsub.f32 %v548, %v560
        %v645 = vsub.f32 %v549, %v561
        %v646 = vsub.f32 %v558, %v570
        %v647 = vsub.f32 %v559, %v571
        %v648 = vsub.f32 %v560, %v572
        %v649 = vsub.f32 %v561, %v573
        %v650 = vsub.f32 %v570, %v582
        %v651 = vsub.f32 %v571, %v583
        %v652 = vsub.f32 %v572, %v584
        %v653 = vsub.f32 %v573, %v585
        %v654 = vsub.f32 %v582, %v594
        %v655 = vsub.f32 %v583, %v595
        %v656 = vsub.f32 %v584, %v596
        %v657 = vsub.f32 %v585, %v597
        %v658 = vsub.f32 %v594, %v606
        %v659 = vsub.f32 %v595, %v607
        %v660 = vsub.f32 %v596, %v608
        %v661 = vsub.f32 %v597, %v609
        %v662 = vsub.f32 %v606, %v618
        %v663 = vsub.f32 %v607, %v619
        %v664 = vsub.f32 %v608, %v620
        %v665 = vsub.f32 %v609, %v621
        %v666 = vsub.f32 %v474, 1.0
        %v667 = vsub.f32 %v475, 1.0
        %v668 = vsub.f32 %v476, 1.0
        %v669 = vsub.f32 %v477, 1.0
        %v670 = vsub.f32 %v474, 2.0
        %v671 = vsub.f32 %v475, 2.0
        %v672 = vsub.f32 %v476, 2.0
        %v673 = vsub.f32 %v477, 2.0
        %v674 = vsub.f32 %v474, 3.0
        %v675 = vsub.f32 %v475, 3.0
        %v676 = vsub.f32 %v476, 3.0
        %v677 = vsub.f32 %v477, 3.0
        %v678 = vsub.f32 %v474, 4.0
        %v679 = vsub.f32 %v475, 4.0
        %v680 = vsub.f32 %v476, 4.0
        %v681 = vsub.f32 %v477, 4.0
        %v682 = vsub.f32 %v474, 5.0
        %v683 = vsub.f32 %v475, 5.0
        %v684 = vsub.f32 %v476, 5.0
        %v685 = vsub.f32 %v477, 5.0
        %v686 = vsub.f32 %v474, 6.0
        %v687 = vsub.f32 %v475, 6.0
        %v688 = vsub.f32 %v476, 6.0
        %v689 = vsub.f32 %v477, 6.0
        %v690 = vsub.f32 %v474, 7.0
        %v691 = vsub.f32 %v475, 7.0
        %v692 = vsub.f32 %v476, 7.0
        %v693 = vsub.f32 %v477, 7.0
        %v694 = vsub.f32 %v474, 8.0
        %v695 = vsub.f32 %v475, 8.0
        %v696 = vsub.f32 %v476, 8.0
        %v697 = vsub.f32 %v477, 8.0
        %v698 = vsub.f32 %v474, 9.0
        %v699 = vsub.f32 %v475, 9.0
        %v700 = vsub.f32 %v476, 9.0
        %v701 = vsub.f32 %v477, 9.0
        %v702 = vmul.f32 %v474, %v622
        %v703 = vmul.f32 %v475, %v623
        %v704 = vmul.f32 %v476, %v624
        %v705 = vmul.f32 %v477, %v625
        %v706 = vsub.f32 2.0, %v474
        %v707 = vsub.f32 2.0, %v475
        %v708 = vsub.f32 2.0, %v476
        %v709 = vsub.f32 2.0, %v477
        %v710 = vmul.f32 %v706, %v626
        %v711 = vmul.f32 %v707, %v627
        %v712 = vmul.f32 %v708, %v628
        %v713 = vmul.f32 %v709, %v629
        %v714 = vadd.f32 %v702, %v710
        %v715 = vadd.f32 %v703, %v711
        %v716 = vadd.f32 %v704, %v712
        %v717 = vadd.f32 %v705, %v713
        %v718 = vmul.f32 %v666, %v626
        %v719 = vmul.f32 %v667, %v627
        %v720 = vmul.f32 %v668, %v628
        %v721 = vmul.f32 %v669, %v629
        %v722 = vsub.f32 2.0, %v666
        %v723 = vsub.f32 2.0, %v667
        %v724 = vsub.f32 2.0, %v668
        %v725 = vsub.f32 2.0, %v669
        %v726 = vmul.f32 %v722, %v630
        %v727 = vmul.f32 %v723, %v631
        %v728 = vmul.f32 %v724, %v632
        %v729 = vmul.f32 %v725, %v633
        %v730 = vadd.f32 %v718, %v726
        %v731 = vadd.f32 %v719, %v727
        %v732 = vadd.f32 %v720, %v728
        %v733 = vadd.f32 %v721, %v729
        %v734 = vmul.f32 %v670, %v630
        %v735 = vmul.f32 %v671, %v631
        %v736 = vmul.f32 %v672, %v632
        %v737 = vmul.f32 %v673, %v633
        %v738 = vsub.f32 2.0, %v670
        %v739 = vsub.f32 2.0, %v671
        %v740 = vsub.f32 2.0, %v672
        %v741 = vsub.f32 2.0, %v673
        %v742 = vmul.f32 %v738, %v634
        %v743 = vmul.f32 %v739, %v635
        %v744 = vmul.f32 %v740, %v636
        %v745 = vmul.f32 %v741, %v637
        %v746 = vadd.f32 %v734, %v742
        %v747 = vadd.f32 %v735, %v743
        %v748 = vadd.f32 %v736, %v744
        %v749 = vadd.f32 %v737, %v745
        %v750 = vmul.f32 %v674, %v634
        %v751 = vmul.f32 %v675, %v635
        %v752 = vmul.f32 %v676, %v636
        %v753 = vmul.f32 %v677, %v637
        %v754 = vsub.f32 2.0, %v674
        %v755 = vsub.f32 2.0, %v675
        %v756 = vsub.f32 2.0, %v676
        %v757 = vsub.f32 2.0, %v677
        %v758 = vmul.f32 %v754, %v638
        %v759 = vmul.f32 %v755, %v639
        %v760 = vmul.f32 %v756, %v640
        %v761 = vmul.f32 %v757, %v641
        %v762 = vadd.f32 %v750, %v758
        %v763 = vadd.f32 %v751, %v759
        %v764 = vadd.f32 %v752, %v760
        %v765 = vadd.f32 %v753, %v761
        %v766 = vmul.f32 %v678, %v638
        %v767 = vmul.f32 %v679, %v639
        %v768 = vmul.f32 %v680, %v640
        %v769 = vmul.f32 %v681, %v641
        %v770 = vsub.f32 2.0, %v678
        %v771 = vsub.f32 2.0, %v679
        %v772 = vsub.f32 2.0, %v680
        %v773 = vsub.f32 2.0, %v681
        %v774 = vmul.f32 %v770, %v642
        %v775 = vmul.f32 %v771, %v643
        %v776 = vmul.f32 %v772, %v644
        %v777 = vmul.f32 %v773, %v645
        %v778 = vadd.f32 %v766, %v774
        %v779 = vadd.f32 %v767, %v775
        %v780 = vadd.f32 %v768, %v776
        %v781 = vadd.f32 %v769, %v777
        %v782 = vmul.f32 %v682, %v642
        %v783 = vmul.f32 %v683, %v643
        %v784 = vmul.f32 %v684, %v644
        %v785 = vmul.f32 %v685, %v645
        %v786 = vsub.f32 2.0, %v682
        %v787 = vsub.f32 2.0, %v683
        %v788 = vsub.f32 2.0, %v684
        %v789 = vsub.f32 2.0, %v685
        %v790 = vmul.f32 %v786, %v646
        %v791 = vmul.f32 %v787, %v647
        %v792 = vmul.f32 %v788, %v648
        %v793 = vmul.f32 %v789, %v649
        %v794 = vadd.f32 %v782, %v790
        %v795 = vadd.f32 %v783, %v791
        %v796 = vadd.f32 %v784, %v792
        %v797 = vadd.f32 %v785, %v793
        %v798 = vmul.f32 %v686, %v646
        %v799 = vmul.f32 %v687, %v647
        %v800 = vmul.f32 %v688, %v648
        %v801 = vmul.f32 %v689, %v649
        %v802 = vsub.f32 2.0, %v686
        %v803 = vsub.f32 2.0, %v687
        %v804 = vsub.f32 2.0, %v688
        %v805 = vsub.f32 2.0, %v689
        %v806 = vmul.f32 %v802, %v650
        %v807 = vmul.f32 %v803, %v651
        %v808 = vmul.f32 %v804, %v652
        %v809 = vmul.f32 %v805, %v653
        %v810 = vadd.f32 %v798, %v806
        %v811 = vadd.f32 %v799, %v807
        %v812 = vadd.f32 %v800, %v808
        %v813 = vadd.f32 %v801, %v809
        %v814 = vmul.f32 %v690, %v650
        %v815 = vmul.f32 %v691, %v651
        %v816 = vmul.f32 %v692, %v652
        %v817 = vmul.f32 %v693, %v653
        %v818 = vsub.f32 2.0, %v690
        %v819 = vsub.f32 2.0, %v691
        %v820 = vsub.f32 2.0, %v692
        %v821 = vsub.f32 2.0, %v693
        %v822 = vmul.f32 %v818, %v654
        %v823 = vmul.f32 %v819, %v655
        %v824 = vmul.f32 %v820, %v656
        %v825 = vmul.f32 %v821, %v657
        %v826 = vadd.f32 %v814, %v822
        %v827 = vadd.f32 %v815, %v823
        %v828 = vadd.f32 %v816, %v824
        %v829 = vadd.f32 %v817, %v825
        %v830 = vmul.f32 %v694, %v654
        %v831 = vmul.f32 %v695, %v655
        %v832 = vmul.f32 %v696, %v656
        %v833 = vmul.f32 %v697, %v657
        %v834 = vsub.f32 2.0, %v694
        %v835 = vsub.f32 2.0, %v695
        %v836 = vsub.f32 2.0, %v696
        %v837 = vsub.f32 2.0, %v697
        %v838 = vmul.f32 %v834, %v658
        %v839 = vmul.f32 %v835, %v659
        %v840 = vmul.f32 %v836, %v660
        %v841 = vmul.f32 %v837, %v661
        %v842 = vadd.f32 %v830, %v838
        %v843 = vadd.f32 %v831, %v839
        %v844 = vadd.f32 %v832, %v840
        %v845 = vadd.f32 %v833, %v841
        %v846 = vmul.f32 %v698, %v658
        %v847 = vmul.f32 %v699, %v659
        %v848 = vmul.f32 %v700, %v660
        %v849 = vmul.f32 %v701, %v661
        %v850 = vsub.f32 2.0, %v698
        %v851 = vsub.f32 2.0, %v699
        %v852 = vsub.f32 2.0, %v700
        %v853 = vsub.f32 2.0, %v701
        %v854 = vmul.f32 %v850, %v662
        %v855 = vmul.f32 %v851, %v663
        %v856 = vmul.f32 %v852, %v664
        %v857 = vmul.f32 %v853, %v665
        %v858 = vadd.f32 %v846, %v854
        %v859 = vadd.f32 %v847, %v855
        %v860 = vadd.f32 %v848, %v856
        %v861 = vadd.f32 %v849, %v857
        %v862 = vmul.f32 %v474, %v714
        %v863 = vmul.f32 %v475, %v715
        %v864 = vmul.f32 %v476, %v716
        %v865 = vmul.f32 %v477, %v717
        %v866 = vsub.f32 3.0, %v474
        %v867 = vsub.f32 3.0, %v475
        %v868 = vsub.f32 3.0, %v476
        %v869 = vsub.f32 3.0, %v477
        %v870 = vmul.f32 %v866, %v730
        %v871 = vmul.f32 %v867, %v731
        %v872 = vmul.f32 %v868, %v732
        %v873 = vmul.f32 %v869, %v733
        %v874 = vadd.f32 %v862, %v870
        %v875 = vadd.f32 %v863, %v871
        %v876 = vadd.f32 %v864, %v872
        %v877 = vadd.f32 %v865, %v873
        %v878 = vmul.f32 %v874, 0.5
        %v879 = vmul.f32 %v875, 0.5
        %v880 = vmul.f32 %v876, 0.5
        %v881 = vmul.f32 %v877, 0.5
        %v882 = vmul.f32 %v666, %v730
        %v883 = vmul.f32 %v667, %v731
        %v884 = vmul.f32 %v668, %v732
        %v885 = vmul.f32 %v669, %v733
        %v886 = vsub.f32 3.0, %v666
        %v887 = vsub.f32 3.0, %v667
        %v888 = vsub.f32 3.0, %v668
        %v889 = vsub.f32 3.0, %v669
        %v890 = vmul.f32 %v886, %v746
        %v891 = vmul.f32 %v887, %v747
        %v892 = vmul.f32 %v888, %v748
        %v893 = vmul.f32 %v889, %v749
        %v894 = vadd.f32 %v882, %v890
        %v895 = vadd.f32 %v883, %v891
        %v896 = vadd.f32 %v884, %v892
        %v897 = vadd.f32 %v885, %v893
        %v898 = vmul.f32 %v894, 0.5
        %v899 = vmul.f32 %v895, 0.5
        %v900 = vmul.f32 %v896, 0.5
        %v901 = vmul.f32 %v897, 0.5
        %v902 = vmul.f32 %v670, %v746
        %v903 = vmul.f32 %v671, %v747
        %v904 = vmul.f32 %v672, %v748
        %v905 = vmul.f32 %v673, %v749
        %v906 = vsub.f32 3.0, %v670
        %v907 = vsub.f32 3.0, %v671
        %v908 = vsub.f32 3.0, %v672
        %v909 = vsub.f32 3.0, %v673
        %v910 = vmul.f32 %v906, %v762
        %v911 = vmul.f32 %v907, %v763
        %v912 = vmul.f32 %v908, %v764
        %v913 = vmul.f32 %v909, %v765
        %v914 = vadd.f32 %v902, %v910
        %v915 = vadd.f32 %v903, %v911
        %v916 = vadd.f32 %v904, %v912
        %v917 = vadd.f32 %v905, %v913
        %v918 = vmul.f32 %v914, 0.5
        %v919 = vmul.f32 %v915, 0.5
        %v920 = vmul.f32 %v916, 0.5
        %v921 = vmul.f32 %v917, 0.5
        %v922 = vmul.f32 %v674, %v762
        %v923 = vmul.f32 %v675, %v763
        %v924 = vmul.f32 %v676, %v764
        %v925 = vmul.f32 %v677, %v765
        %v926 = vsub.f32 3.0, %v674
        %v927 = vsub.f32 3.0, %v675
        %v928 = vsub.f32 3.0, %v676
        %v929 = vsub.f32 3.0, %v677
        %v930 = vmul.f32 %v926, %v778
        %v931 = vmul.f32 %v927, %v779
        %v932 = vmul.f32 %v928, %v780
        %v933 = vmul.f32 %v929, %v781
        %v934 = vadd.f32 %v922, %v930
        %v935 = vadd.f32 %v923, %v931
        %v936 = vadd.f32 %v924, %v932
        %v937 = vadd.f32 %v925, %v933
        %v938 = vmul.f32 %v934, 0.5
        %v939 = vmul.f32 %v935, 0.5
        %v940 = vmul.f32 %v936, 0.5
        %v941 = vmul.f32 %v937, 0.5
        %v942 = vmul.f32 %v678, %v778
        %v943 = vmul.f32 %v679, %v779
        %v944 = vmul.f32 %v680, %v780
        %v945 = vmul.f32 %v681, %v781
        %v946 = vsub.f32 3.0, %v678
        %v947 = vsub.f32 3.0, %v679
        %v948 = vsub.f32 3.0, %v680
        %v949 = vsub.f32 3.0, %v681
        %v950 = vmul.f32 %v946, %v794
        %v951 = vmul.f32 %v947, %v795
        %v952 = vmul.f32 %v948, %v796
        %v953 = vmul.f32 %v949, %v797
        %v954 = vadd.f32 %v942, %v950
        %v955 = vadd.f32 %v943, %v951
        %v956 = vadd.f32 %v944, %v952
        %v957 = vadd.f32 %v945, %v953
        %v958 = vmul.f32 %v954, 0.5
        %v959 = vmul.f32 %v955, 0.5
        %v960 = vmul.f32 %v956, 0.5
        %v961 = vmul.f32 %v957, 0.5
        %v962 = vmul.f32 %v682, %v794
        %v963 = vmul.f32 %v683, %v795
        %v964 = vmul.f32 %v684, %v796
        %v965 = vmul.f32 %v685, %v797
        %v966 = vsub.f32 3.0, %v682
        %v967 = vsub.f32 3.0, %v683
        %v968 = vsub.f32 3.0, %v684
        %v969 = vsub.f32 3.0, %v685
        %v970 = vmul.f32 %v966, %v810
        %v971 = vmul.f32 %v967, %v811
        %v972 = vmul.f32 %v968, %v812
        %v973 = vmul.f32 %v969, %v813
        %v974 = vadd.f32 %v962, %v970
        %v975 = vadd.f32 %v963, %v971
        %v976 = vadd.f32 %v964, %v972
        %v977 = vadd.f32 %v965, %v973
        %v978 = vmul.f32 %v974, 0.5
        %v979 = vmul.f32 %v975, 0.5
        %v980 = vmul.f32 %v976, 0.5
        %v981 = vmul.f32 %v977, 0.5
        %v982 = vmul.f32 %v686, %v810
        %v983 = vmul.f32 %v687, %v811
        %v984 = vmul.f32 %v688, %v812
        %v985 = vmul.f32 %v689, %v813
        %v986 = vsub.f32 3.0, %v686
        %v987 = vsub.f32 3.0, %v687
        %v988 = vsub.f32 3.0, %v688
        %v989 = vsub.f32 3.0, %v689
        %v990 = vmul.f32 %v986, %v826
        %v991 = vmul.f32 %v987, %v827
        %v992 = vmul.f32 %v988, %v828
        %v993 = vmul.f32 %v989, %v829
        %v994 = vadd.f32 %v982, %v990
        %v995 = vadd.f32 %v983, %v991
        %v996 = vadd.f32 %v984, %v992
        %v997 = vadd.f32 %v985, %v993
        %v998 = vmul.f32 %v994, 0.5
        %v999 = vmul.f32 %v995, 0.5
        %v1000 = vmul.f32 %v996, 0.5
        %v1001 = vmul.f32 %v997, 0.5
        %v1002 = vmul.f32 %v690, %v826
        %v1003 = vmul.f32 %v691, %v827
        %v1004 = vmul.f32 %v692, %v828
        %v1005 = vmul.f32 %v693, %v829
        %v1006 = vsub.f32 3.0, %v690
        %v1007 = vsub.f32 3.0, %v691
        %v1008 = vsub.f32 3.0, %v692
        %v1009 = vsub.f32 3.0, %v693
        %v1010 = vmul.f32 %v1006, %v842
        %v1011 = vmul.f32 %v1007, %v843
        %v1012 = vmul.f32 %v1008, %v844
        %v1013 = vmul.f32 %v1009, %v845
        %v1014 = vadd.f32 %v1002, %v1010
        %v1015 = vadd.f32 %v1003, %v1011
        %v1016 = vadd.f32 %v1004, %v1012
        %v1017 = vadd.f32 %v1005, %v1013
        %v1018 = vmul.f32 %v1014, 0.5
        %v1019 = vmul.f32 %v1015, 0.5
        %v1020 = vmul.f32 %v1016, 0.5
        %v1021 = vmul.f32 %v1017, 0.5
        %v1022 = vmul.f32 %v694, %v842
        %v1023 = vmul.f32 %v695, %v843
        %v1024 = vmul.f32 %v696, %v844
        %v1025 = vmul.f32 %v697, %v845
        %v1026 = vsub.f32 3.0, %v694
        %v1027 = vsub.f32 3.0, %v695
        %v1028 = vsub.f32 3.0, %v696
        %v1029 = vsub.f32 3.0, %v697
        %v1030 = vmul.f32 %v1026, %v858
        %v1031 = vmul.f32 %v1027, %v859
        %v1032 = vmul.f32 %v1028, %v860
        %v1033 = vmul.f32 %v1029, %v861
        %v1034 = vadd.f32 %v1022, %v1030
        %v1035 = vadd.f32 %v1023, %v1031
        %v1036 = vadd.f32 %v1024, %v1032
        %v1037 = vadd.f32 %v1025, %v1033
        %v1038 = vmul.f32 %v1034, 0.5
        %v1039 = vmul.f32 %v1035, 0.5
        %v1040 = vmul.f32 %v1036, 0.5
        %v1041 = vmul.f32 %v1037, 0.5
        %v1042 = vmul.f32 %v474, %v878
        %v1043 = vmul.f32 %v475, %v879
        %v1044 = vmul.f32 %v476, %v880
        %v1045 = vmul.f32 %v477, %v881
        %v1046 = vsub.f32 4.0, %v474
        %v1047 = vsub.f32 4.0, %v475
        %v1048 = vsub.f32 4.0, %v476
        %v1049 = vsub.f32 4.0, %v477
        %v1050 = vmul.f32 %v1046, %v898
        %v1051 = vmul.f32 %v1047, %v899
        %v1052 = vmul.f32 %v1048, %v900
        %v1053 = vmul.f32 %v1049, %v901
        %v1054 = vadd.f32 %v1042, %v1050
        %v1055 = vadd.f32 %v1043, %v1051
        %v1056 = vadd.f32 %v1044, %v1052
        %v1057 = vadd.f32 %v1045, %v1053
        %v1058 = vmul.f32 %v1054, 0.33333334
        %v1059 = vmul.f32 %v1055, 0.33333334
        %v1060 = vmul.f32 %v1056, 0.33333334
        %v1061 = vmul.f32 %v1057, 0.33333334
        %v1062 = vmul.f32 %v666, %v898
        %v1063 = vmul.f32 %v667, %v899
        %v1064 = vmul.f32 %v668, %v900
        %v1065 = vmul.f32 %v669, %v901
        %v1066 = vsub.f32 4.0, %v666
        %v1067 = vsub.f32 4.0, %v667
        %v1068 = vsub.f32 4.0, %v668
        %v1069 = vsub.f32 4.0, %v669
        %v1070 = vmul.f32 %v1066, %v918
        %v1071 = vmul.f32 %v1067, %v919
        %v1072 = vmul.f32 %v1068, %v920
        %v1073 = vmul.f32 %v1069, %v921
        %v1074 = vadd.f32 %v1062, %v1070
        %v1075 = vadd.f32 %v1063, %v1071
        %v1076 = vadd.f32 %v1064, %v1072
        %v1077 = vadd.f32 %v1065, %v1073
        %v1078 = vmul.f32 %v1074, 0.33333334
        %v1079 = vmul.f32 %v1075, 0.33333334
        %v1080 = vmul.f32 %v1076, 0.33333334
        %v1081 = vmul.f32 %v1077, 0.33333334
        %v1082 = vmul.f32 %v670, %v918
        %v1083 = vmul.f32 %v671, %v919
        %v1084 = vmul.f32 %v672, %v920
        %v1085 = vmul.f32 %v673, %v921
        %v1086 = vsub.f32 4.0, %v670
        %v1087 = vsub.f32 4.0, %v671
        %v1088 = vsub.f32 4.0, %v672
        %v1089 = vsub.f32 4.0, %v673
        %v1090 = vmul.f32 %v1086, %v938
        %v1091 = vmul.f32 %v1087, %v939
        %v1092 = vmul.f32 %v1088, %v940
        %v1093 = vmul.f32 %v1089, %v941
        %v1094 = vadd.f32 %v1082, %v1090
        %v1095 = vadd.f32 %v1083, %v1091
        %v1096 = vadd.f32 %v1084, %v1092
        %v1097 = vadd.f32 %v1085, %v1093
        %v1098 = vmul.f32 %v1094, 0.33333334
        %v1099 = vmul.f32 %v1095, 0.33333334
        %v1100 = vmul.f32 %v1096, 0.33333334
        %v1101 = vmul.f32 %v1097, 0.33333334
        %v1102 = vmul.f32 %v674, %v938
        %v1103 = vmul.f32 %v675, %v939
        %v1104 = vmul.f32 %v676, %v940
        %v1105 = vmul.f32 %v677, %v941
        %v1106 = vsub.f32 4.0, %v674
        %v1107 = vsub.f32 4.0, %v675
        %v1108 = vsub.f32 4.0, %v676
        %v1109 = vsub.f32 4.0, %v677
        %v1110 = vmul.f32 %v1106, %v958
        %v1111 = vmul.f32 %v1107, %v959
        %v1112 = vmul.f32 %v1108, %v960
        %v1113 = vmul.f32 %v1109, %v961
        %v1114 = vadd.f32 %v1102, %v1110
        %v1115 = vadd.f32 %v1103, %v1111
        %v1116 = vadd.f32 %v1104, %v1112
        %v1117 = vadd.f32 %v1105, %v1113
        %v1118 = vmul.f32 %v1114, 0.33333334
        %v1119 = vmul.f32 %v1115, 0.33333334
        %v1120 = vmul.f32 %v1116, 0.33333334
        %v1121 = vmul.f32 %v1117, 0.33333334
        %v1122 = vmul.f32 %v678, %v958
        %v1123 = vmul.f32 %v679, %v959
        %v1124 = vmul.f32 %v680, %v960
        %v1125 = vmul.f32 %v681, %v961
        %v1126 = vsub.f32 4.0, %v678
        %v1127 = vsub.f32 4.0, %v679
        %v1128 = vsub.f32 4.0, %v680
        %v1129 = vsub.f32 4.0, %v681
        %v1130 = vmul.f32 %v1126, %v978
        %v1131 = vmul.f32 %v1127, %v979
        %v1132 = vmul.f32 %v1128, %v980
        %v1133 = vmul.f32 %v1129, %v981
        %v1134 = vadd.f32 %v1122, %v1130
        %v1135 = vadd.f32 %v1123, %v1131
        %v1136 = vadd.f32 %v1124, %v1132
        %v1137 = vadd.f32 %v1125, %v1133
        %v1138 = vmul.f32 %v1134, 0.33333334
        %v1139 = vmul.f32 %v1135, 0.33333334
        %v1140 = vmul.f32 %v1136, 0.33333334
        %v1141 = vmul.f32 %v1137, 0.33333334
        %v1142 = vmul.f32 %v682, %v978
        %v1143 = vmul.f32 %v683, %v979
        %v1144 = vmul.f32 %v684, %v980
        %v1145 = vmul.f32 %v685, %v981
        %v1146 = vsub.f32 4.0, %v682
        %v1147 = vsub.f32 4.0, %v683
        %v1148 = vsub.f32 4.0, %v684
        %v1149 = vsub.f32 4.0, %v685
        %v1150 = vmul.f32 %v1146, %v998
        %v1151 = vmul.f32 %v1147, %v999
        %v1152 = vmul.f32 %v1148, %v1000
        %v1153 = vmul.f32 %v1149, %v1001
        %v1154 = vadd.f32 %v1142, %v1150
        %v1155 = vadd.f32 %v1143, %v1151
        %v1156 = vadd.f32 %v1144, %v1152
        %v1157 = vadd.f32 %v1145, %v1153
        %v1158 = vmul.f32 %v1154, 0.33333334
        %v1159 = vmul.f32 %v1155, 0.33333334
        %v1160 = vmul.f32 %v1156, 0.33333334
        %v1161 = vmul.f32 %v1157, 0.33333334
        %v1162 = vmul.f32 %v686, %v998
        %v1163 = vmul.f32 %v687, %v999
        %v1164 = vmul.f32 %v688, %v1000
        %v1165 = vmul.f32 %v689, %v1001
        %v1166 = vsub.f32 4.0, %v686
        %v1167 = vsub.f32 4.0, %v687
        %v1168 = vsub.f32 4.0, %v688
        %v1169 = vsub.f32 4.0, %v689
        %v1170 = vmul.f32 %v1166, %v1018
        %v1171 = vmul.f32 %v1167, %v1019
        %v1172 = vmul.f32 %v1168, %v1020
        %v1173 = vmul.f32 %v1169, %v1021
        %v1174 = vadd.f32 %v1162, %v1170
        %v1175 = vadd.f32 %v1163, %v1171
        %v1176 = vadd.f32 %v1164, %v1172
        %v1177 = vadd.f32 %v1165, %v1173
        %v1178 = vmul.f32 %v1174, 0.33333334
        %v1179 = vmul.f32 %v1175, 0.33333334
        %v1180 = vmul.f32 %v1176, 0.33333334
        %v1181 = vmul.f32 %v1177, 0.33333334
        %v1182 = vmul.f32 %v690, %v1018
        %v1183 = vmul.f32 %v691, %v1019
        %v1184 = vmul.f32 %v692, %v1020
        %v1185 = vmul.f32 %v693, %v1021
        %v1186 = vsub.f32 4.0, %v690
        %v1187 = vsub.f32 4.0, %v691
        %v1188 = vsub.f32 4.0, %v692
        %v1189 = vsub.f32 4.0, %v693
        %v1190 = vmul.f32 %v1186, %v1038
        %v1191 = vmul.f32 %v1187, %v1039
        %v1192 = vmul.f32 %v1188, %v1040
        %v1193 = vmul.f32 %v1189, %v1041
        %v1194 = vadd.f32 %v1182, %v1190
        %v1195 = vadd.f32 %v1183, %v1191
        %v1196 = vadd.f32 %v1184, %v1192
        %v1197 = vadd.f32 %v1185, %v1193
        %v1198 = vmul.f32 %v1194, 0.33333334
        %v1199 = vmul.f32 %v1195, 0.33333334
        %v1200 = vmul.f32 %v1196, 0.33333334
        %v1201 = vmul.f32 %v1197, 0.33333334
        %vm1202 = vcmask 261120
        %v1204 = vsel %vm1202, %v442, 0
        %v1207 = vsel %vm1202, %v445, 0
        %1209 = vmatpush.msra.mxu0 %v1101
        %1210 = vmatpush.msra.mxu0 %v1100
        %1211 = vmatpush.msra.mxu0 %v1099
        %1212 = vmatpush.msra.mxu0 %v1098
        %1213 = vmatpush.msra.mxu0 %v1081
        %1214 = vmatpush.msra.mxu0 %v1080
        %1215 = vmatpush.msra.mxu0 %v1079
        %1216 = vmatpush.msra.mxu0 %v1078
        %1217 = vmatpush.msra.mxu0 %v1061
        %1218 = vmatpush.msra.mxu0 %v1060
        %1219 = vmatpush.msra.mxu0 %v1059
        %1220 = vmatpush.msra.mxu0 %v1058
        %1221 = vmatpush.msra.mxu0 %v469
        %1222 = vmatpush.msra.mxu0 %v468
        %1223 = vmatpush.msra.mxu0 %v467
        %1224 = vmatpush.msra.mxu0 %v466
        %1225 = vmatmul.f32.gmra.mxu0 %v440
        %v1226 = vpop.f32.mrf.mxu0
        %v1227 = vadd.f32 0.0, %v1226
        %1228 = vmatmul.f32.gmra.mxu0 %v443
        %v1229 = vpop.f32.mrf.mxu0
        %v1230 = vadd.f32 0.0, %v1229
        %1231 = vdwg.mxu0
        %1232 = vmatpush.msra.mxu0 %v1181
        %1233 = vmatpush.msra.mxu0 %v1180
        %1234 = vmatpush.msra.mxu0 %v1179
        %1235 = vmatpush.msra.mxu0 %v1178
        %1236 = vmatpush.msra.mxu0 %v1161
        %1237 = vmatpush.msra.mxu0 %v1160
        %1238 = vmatpush.msra.mxu0 %v1159
        %1239 = vmatpush.msra.mxu0 %v1158
        %1240 = vmatpush.msra.mxu0 %v1141
        %1241 = vmatpush.msra.mxu0 %v1140
        %1242 = vmatpush.msra.mxu0 %v1139
        %1243 = vmatpush.msra.mxu0 %v1138
        %1244 = vmatpush.msra.mxu0 %v1121
        %1245 = vmatpush.msra.mxu0 %v1120
        %1246 = vmatpush.msra.mxu0 %v1119
        %1247 = vmatpush.msra.mxu0 %v1118
        %1248 = vmatmul.f32.gmra.mxu0 %v441
        %v1249 = vpop.f32.mrf.mxu0
        %v1250 = vadd.f32 %v1227, %v1249
        %1251 = vmatmul.f32.gmra.mxu0 %v444
        %v1252 = vpop.f32.mrf.mxu0
        %v1253 = vadd.f32 %v1230, %v1252
        %1254 = vdwg.mxu0
        %1255 = vmatpush.msra.mxu0 0.0
        %1256 = vmatpush.msra.mxu0 0.0
        %1257 = vmatpush.msra.mxu0 0.0
        %1258 = vmatpush.msra.mxu0 0.0
        %1259 = vmatpush.msra.mxu0 0.0
        %1260 = vmatpush.msra.mxu0 0.0
        %1261 = vmatpush.msra.mxu0 0.0
        %1262 = vmatpush.msra.mxu0 0.0
        %1263 = vmatpush.msra.mxu0 0.0
        %1264 = vmatpush.msra.mxu0 0.0
        %1265 = vmatpush.msra.mxu0 0.0
        %1266 = vmatpush.msra.mxu0 0.0
        %1267 = vmatpush.msra.mxu0 %v1201
        %1268 = vmatpush.msra.mxu0 %v1200
        %1269 = vmatpush.msra.mxu0 %v1199
        %1270 = vmatpush.msra.mxu0 %v1198
        %1271 = vmatmul.f32.gmra.mxu0 %v1204
        %v1272 = vpop.f32.mrf.mxu0
        %v1273 = vadd.f32 %v1250, %v1272
        %1274 = vmatmul.f32.gmra.mxu0 %v1207
        %v1275 = vpop.f32.mrf.mxu0
        %v1276 = vadd.f32 %v1253, %v1275
        %1277 = vdwg.mxu0
        %1278 = vst [vmem:[%s195] sm:$0xff] %v1273
        %1279 = vst [vmem:[%s195 + $0x8] sm:$0xff] %v1276
        %s1280 = sand.u32 %s95, 1
        %s1281 = scalar_lea.sflag [#allocation4], %s1280
        %s1282 = sand.u32 %s95, 1
        %s1283 = smul.addr %s1282, 16
        %s1284 = scalar_lea.vmem [#allocation7], %s1283
        // Predicated region
        $region41: #{kan_forward_pallas.1} parent=31 // pred_check
          %p1285 = pneg %p105
        $region42: #{kan_forward_pallas.1} parent=31 // pred_check_branch
          %1287 = sbr.rel (%p1285) target = $region44
        $region43: #{kan_forward_pallas.1} parent=31 // pred_region
          %1289 = vsyncadd %s1281, 0
          %s1290 = smul.addr %s19, 8
          %s1291 = scalar_lea.hbm %s3, %s1290
          %s1292 = sshll.u32 %s1284, 4
          %s1293 = int_to_ptr.vmem [resolvable:$true] %s1292
          %s1294 = sshll.u32 %s1291, 4
          %s1295 = int_to_ptr.hbm [resolvable:$true] %s1294
          %1300 = dma.vmem_to_hbm [thread:$0]  %s1293, 256, %s1295, %s1281, 128, 256, 8
        $region44: #{kan_forward_pallas.1} parent=31 // pred_fallthru
          _
      $region32: #{kan_forward_pallas.1} parent=5 // pred_fallthru
        _
      %p1301 = scmp.le.s32.totalorder 2, %s14
      // Predicated region
      $region45: #{kan_forward_pallas.1} parent=5 // pred_check
        %p1302 = pneg %p1301
      $region46: #{kan_forward_pallas.1} parent=5 // pred_check_branch
        %1304 = sbr.rel (%p1302) target = $region48
      $region47: #{kan_forward_pallas.1} parent=5 // pred_region
        %s1305 = ssub.s32 %s14, 2
        // Predicated region
        $region49: #{kan_forward_pallas.1} parent=47 // pred_check
          %p1306 = pneg %p111
        $region50: #{kan_forward_pallas.1} parent=47 // pred_check_branch
          %1308 = sbr.rel (%p1306) target = $region52
        $region51: #{kan_forward_pallas.1} parent=47 // pred_region
          %s1309 = sand.u32 %s96, 1
          %s1310 = scalar_lea.sflag [#allocation4], %s1309
          %s1311 = sand.u32 %s96, 1
          %s1312 = smul.addr %s1311, 16
          %s1313 = scalar_lea.vmem [#allocation7], %s1312
          %1315 = dma.done %s1310, 256
        $region52: #{kan_forward_pallas.1} parent=47 // pred_fallthru
          _
      $region48: #{kan_forward_pallas.1} parent=5 // pred_fallthru
        _
    $region6: #{kan_forward_pallas.1} parent=1 // loop_footer
      %s18 = sadd.s32 1, %s14
    $region7: #{kan_forward_pallas.1} parent=1 // loop_footer_branch
      %13 = sbr.rel target = $region3
    $region8: #{kan_forward_pallas.1} parent=1 // loop_exit
      _
    %1316 = vsyncpa [#allocation3], 1
    %s1317 = scalar_lea.sflag [#allocation3], 1
    %1318 = vsyncpa %s1317, 1
    %1319 = vsyncpa [#allocation6], 1
    %1320 = vsyncpa [#allocation4], 1
    %s1321 = scalar_lea.sflag [#allocation4], 1
    %1322 = vsyncpa %s1321, 1

</llo_original>
